<compile_context>
chip_gen: v6e
topology: v6e:2x2x1
jax: 0.10.0
libtpu: 0.0.40
codegen_flags: <defaults>
</compile_context>

<pallas_src>
import math

import jax
import jax.numpy as jnp
from jax.experimental import pallas as pl
from jax.experimental.pallas import tpu as pltpu

GN_EPS = 1e-5   # nn.GroupNorm default eps
LN_EPS = 1e-5   # nn.LayerNorm default eps


# ----------------------------- in-kernel helpers -----------------------------

def _erf(x):
    # erf via the Numerical-Recipes erfc approximation (|rel err| <= 1.2e-7) built from
    # exp/mul/add + one EUP approximate reciprocal — matches exact F.gelu to well below
    # the bf16-matmul error budget.
    ax = jnp.abs(x)
    t = pl.reciprocal(1.0 + 0.5 * ax, approx=True)
    poly = (-1.26551223 + t * (1.00002368 + t * (0.37409196 + t * (0.09678418 +
            t * (-0.18628806 + t * (0.27886807 + t * (-1.13520398 + t * (1.48851587 +
            t * (-0.82215223 + t * 0.17087277)))))))))
    erfc_abs = t * jnp.exp(-ax * ax + poly)
    erf_abs = 1.0 - erfc_abs
    return jnp.where(x >= 0, erf_abs, -erf_abs)


def _gelu_exact(x):
    return 0.5 * x * (1.0 + _erf(x * (1.0 / math.sqrt(2.0))))


def _ln_stats(v):
    # Single-pass LayerNorm statistics (sum + sum-of-squares); clamp guards the tiny
    # fp32 cancellation that can push var epsilon-negative.
    mu = jnp.mean(v, axis=-1, keepdims=True)
    var = jnp.maximum(jnp.mean(v * v, axis=-1, keepdims=True) - mu * mu, 0.0)
    return mu, jax.lax.rsqrt(var + LN_EPS)


def _layernorm_affine(v, w, b):
    mu, rstd = _ln_stats(v)
    return (v - mu) * rstd * w + b


def _layernorm_noaffine(v):
    mu, rstd = _ln_stats(v)
    return (v - mu) * rstd


# --------------------------------- kernel ------------------------------------

def _attn_blk_kernel(x_ref, scale_ref, bias0_ref,
                     win_ref,
                     ln1w_ref, ln1b_ref, ln2w_ref, ln2b_ref,
                     w1a_ref, b1a_ref, w1b_ref, b1b_ref,
                     w2_ref, b2_ref, wout_ref, bout_ref,
                     o_ref):
    x = x_ref[0].astype(jnp.float32)                       # (T, C) raw input tokens

    # GroupNorm (stats precomputed per image) + affine, folded into a per-(batch,channel)
    # scale; the shift is already folded through conv_inp into bias0.
    xs = x * scale_ref[0]                                  # (T, C)

    # conv_inp: 1x1 conv == per-token matmul (bf16 inputs, f32 accumulation).
    h0 = jnp.dot(xs.astype(jnp.bfloat16), win_ref[...],
                 preferred_element_type=jnp.float32) + bias0_ref[0]

    # attn_1 / attn_2 outputs are discarded in the reference forward -> no-op here.
    h1 = _layernorm_affine(h0, ln1w_ref[...], ln1b_ref[...]) + h0
    h2 = _layernorm_affine(h1, ln2w_ref[...], ln2b_ref[...]) + h1

    # LayerNorm3 affine is folded into w1a/w1b/b1a/b1b on the host.
    n3 = _layernorm_noaffine(h2).astype(jnp.bfloat16)

    # GeGLU feed-forward (split weights: never materialize an (T, 8C) tensor).
    a = jnp.dot(n3, w1a_ref[...], preferred_element_type=jnp.float32) + b1a_ref[...]
    g = jnp.dot(n3, w1b_ref[...], preferred_element_type=jnp.float32) + b1b_ref[...]
    ff = a * _gelu_exact(g)
    ff = jnp.dot(ff.astype(jnp.bfloat16), w2_ref[...],
                 preferred_element_type=jnp.float32) + b2_ref[...]
    h4 = ff + h2

    # conv_out (1x1) + long residual (original input tokens).
    out = jnp.dot(h4.astype(jnp.bfloat16), wout_ref[...],
                  preferred_element_type=jnp.float32) + bout_ref[...] + x
    o_ref[0] = out.astype(o_ref.dtype)


# --------------------------------- wrapper -----------------------------------

def _pick_tile_hw(hw):
    for cand in (1024, 512, 256, 128, 64, 32, 16, 8):
        if cand <= hw and hw % cand == 0:
            return cand
    return hw


def _vmem_limit_bytes(tile_hw, c):
    weights = 2 * 14 * c * c + 4 * 16 * c           # bf16 matmul weights + f32 biases/LN params
    io_tiles = 2 * 2 * 4 * tile_hw * c              # double-buffered input + output token tiles
    body = 4 * tile_hw * 24 * c                     # f32 intermediates (h0..h4, a/gate/ff, casts)
    est = 2 * weights + io_tiles + 2 * body
    return int(min(max(2 * est, 32 << 20), 48 << 20))


def unet_attn_blk(img, txt, params, n_groups=32, tile_hw=None):
    """img: (N, C, H, W) float32 -> (N, C, H, W).  txt cannot affect the output
    (attn_2's result is discarded in the reference forward), so it is unused."""
    del txt
    n, c, h, w = img.shape
    hw = h * w
    gs = c // n_groups
    c4 = 4 * c

    if tile_hw is None:
        tile_hw = _pick_tile_hw(hw)
    assert hw % tile_hw == 0, "tile_hw must divide H*W"
    assert tile_hw == hw or tile_hw % 8 == 0, "tile_hw must be a multiple of 8"

    # ---- GroupNorm statistics hoisted out of the kernel (two-pass variance). ----
    xg = img.reshape(n, n_groups, gs * hw).astype(jnp.float32)
    g_mean = jnp.mean(xg, axis=-1)                               # (N, G)
    g_var = jnp.var(xg, axis=-1)                                 # (N, G)
    mean_c = jnp.repeat(g_mean, gs, axis=-1)                     # (N, C)
    invstd_c = jax.lax.rsqrt(jnp.repeat(g_var, gs, axis=-1) + GN_EPS)
    scale_nc = invstd_c * params["gn_w"]                         # GN affine scale folded
    shift_nc = params["gn_b"] - mean_c * scale_nc
    bias0_nc = shift_nc @ params["win"] + params["bin"]          # fold shift through conv_inp
    scale3 = scale_nc[:, None, :]                                # (N, 1, C) — lane-dense block
    bias03 = bias0_nc[:, None, :]                                # (N, 1, C)

    # ---- fold ln3 affine into split GeGLU weights; cast matmul weights to bf16. ----
    w1, b1 = params["w1"], params["b1"]
    ln3w_col = params["ln3w"].reshape(c, 1)
    w1a = w1[:, :c4] * ln3w_col
    w1b = w1[:, c4:] * ln3w_col
    b1a = params["ln3b"] @ w1[:, :c4] + b1[:, :c4]
    b1b = params["ln3b"] @ w1[:, c4:] + b1[:, c4:]

    bf16 = lambda a: a.astype(jnp.bfloat16)
    win_bf, w1a_bf, w1b_bf = bf16(params["win"]), bf16(w1a), bf16(w1b)
    w2_bf, wout_bf = bf16(params["w2"]), bf16(params["wout"])

    # ---- tokens-major activations.  TODO(synk): if the producer can emit NHWC
    # (channels-last) activations, drop this transpose and the matching output one. ----
    x_tok = img.reshape(n, c, hw).transpose(0, 2, 1)             # (N, HW, C)

    const_inputs = [
        win_bf,
        params["ln1w"], params["ln1b"], params["ln2w"], params["ln2b"],
        w1a_bf, b1a, w1b_bf, b1b,
        w2_bf, params["b2"], wout_bf, params["bout"],
    ]

    def full_spec(arr):
        nd = arr.ndim
        return pl.BlockSpec(arr.shape, lambda b, t, _nd=nd: (0,) * _nd)

    in_specs = [
        pl.BlockSpec((1, tile_hw, c), lambda b, t: (b, t, 0)),   # x tokens
        pl.BlockSpec((1, 1, c), lambda b, t: (b, 0, 0)),         # per-batch GN scale
        pl.BlockSpec((1, 1, c), lambda b, t: (b, 0, 0)),         # per-batch conv_inp bias
    ] + [full_spec(p) for p in const_inputs]

    out_tok = pl.pallas_call(
        _attn_blk_kernel,
        out_shape=jax.ShapeDtypeStruct((n, hw, c), img.dtype),
        grid=(n, hw // tile_hw),
        in_specs=in_specs,
        out_specs=pl.BlockSpec((1, tile_hw, c), lambda b, t: (b, t, 0)),
        compiler_params=pltpu.CompilerParams(
            dimension_semantics=("parallel", "parallel"),
            vmem_limit_bytes=_vmem_limit_bytes(tile_hw, c),
        ),
    )(x_tok, scale3, bias03, *const_inputs)

    return out_tok.transpose(0, 2, 1).reshape(n, c, h, w)


# ------------------------------ params & reference ---------------------------

def init_params(key, heads, emb_dim, n_groups=32):
    c = heads * emb_dim
    assert c % n_groups == 0
    ks = list(jax.random.split(key, 16))

    def lin_w(k, fan_in, fan_out):
        return jax.random.normal(k, (fan_in, fan_out), jnp.float32) / math.sqrt(fan_in)

    def lin_b(k, fan_out):
        return 0.02 * jax.random.normal(k, (1, fan_out), jnp.float32)

    def affine(k, dim):
        kw, kb = jax.random.split(k)
        return (1.0 + 0.1 * jax.random.normal(kw, (1, dim), jnp.float32),
                0.1 * jax.random.normal(kb, (1, dim), jnp.float32))

    gn_w, gn_b = affine(ks[0], c)
    ln1w, ln1b = affine(ks[1], c)
    ln2w, ln2b = affine(ks[2], c)
    ln3w, ln3b = affine(ks[3], c)

    return {
        "gn_w": gn_w, "gn_b": gn_b,
        "win": lin_w(ks[4], c, c), "bin": lin_b(ks[5], c),
        "ln1w": ln1w, "ln1b": ln1b, "ln2w": ln2w, "ln2b": ln2b,
        "ln3w": ln3w, "ln3b": ln3b,
        "w1": lin_w(ks[6], c, 8 * c), "b1": lin_b(ks[7], 8 * c),
        "w2": lin_w(ks[8], 4 * c, c), "b2": lin_b(ks[9], c),
        "wout": lin_w(ks[10], c, c), "bout": lin_b(ks[11], c),
    }


def reference(img, params, n_groups=32):
    """Pure-JAX f32 reference matching the PyTorch forward (attention outputs discarded)."""
    n, c, h, w = img.shape
    gs = c // n_groups
    xg = img.reshape(n, n_groups, gs * h * w)
    mu = xg.mean(axis=-1, keepdims=True)
    var = xg.var(axis=-1, keepdims=True)
    xn = ((xg - mu) * jax.lax.rsqrt(var + GN_EPS)).reshape(n, c, h, w)
    xn = xn * params["gn_w"].reshape(1, c, 1, 1) + params["gn_b"].reshape(1, c, 1, 1)

    t = xn.reshape(n, c, h * w).transpose(0, 2, 1)            # (N, HW, C)
    t = t @ params["win"] + params["bin"]

    def ln(v, wn, bn):
        m = v.mean(-1, keepdims=True)
        va = v.var(-1, keepdims=True)
        return (v - m) * jax.lax.rsqrt(va + LN_EPS) * params[wn] + params[bn]

    t = ln(t, "ln1w", "ln1b") + t
    t = ln(t, "ln2w", "ln2b") + t
    t3 = ln(t, "ln3w", "ln3b")
    z = t3 @ params["w1"] + params["b1"]
    a, g = z[..., : 4 * c], z[..., 4 * c:]
    ff = (a * jax.nn.gelu(g, approximate=False)) @ params["w2"] + params["b2"]
    t = ff + t
    out_tok = t @ params["wout"] + params["bout"]
    return out_tok.transpose(0, 2, 1).reshape(n, c, h, w) + img


# ----------------------------------- main -------------------------------------

if __name__ == "__main__":
    heads, emb_dim = 2, 16        # channels = 32 (divisible by 32 GroupNorm groups)
    n, h, w = 2, 8, 8
    s, d_txt = 8, 64

    key = jax.random.PRNGKey(0)
    k_img, k_txt, k_par = jax.random.split(key, 3)
    img = jax.random.normal(k_img, (n, heads * emb_dim, h, w), jnp.float32)
    # txt is an input of the module but cannot affect the output (attn_2 result discarded).
    txt = jax.random.normal(k_txt, (n, s, d_txt), jnp.float32)

    params = init_params(k_par, heads, emb_dim)

    # tile_hw=32 exercises the multi-tile (grid=(N, HW/TILE)) path on the toy shape.
    out = unet_attn_blk(img, txt, params, tile_hw=32)
    out = jax.block_until_ready(out)

    ref = reference(img, params)
    assert out.shape == img.shape
    assert bool(jnp.all(jnp.isfinite(out)))
    # Tolerance reflects bf16 matmul inputs (f32 accumulation); f32 reference above.
    err = float(jnp.max(jnp.abs(out - ref)))
    assert bool(jnp.allclose(out, ref, rtol=5e-2, atol=5e-2)), err

    print("KERNEL_OK")
</pallas_src>

<mosaic_0001>
module attributes {stable_mosaic.version = 11 : i64} {
  func.func @_attn_blk_kernel(%arg0: i32, %arg1: i32, %arg2: memref<1x32x32xf32, #tpu.memory_space<vmem>>, %arg3: memref<1x1x32xf32, #tpu.memory_space<vmem>>, %arg4: memref<1x1x32xf32, #tpu.memory_space<vmem>>, %arg5: memref<32x32xbf16, #tpu.memory_space<vmem>>, %arg6: memref<1x32xf32, #tpu.memory_space<vmem>>, %arg7: memref<1x32xf32, #tpu.memory_space<vmem>>, %arg8: memref<1x32xf32, #tpu.memory_space<vmem>>, %arg9: memref<1x32xf32, #tpu.memory_space<vmem>>, %arg10: memref<32x128xbf16, #tpu.memory_space<vmem>>, %arg11: memref<1x128xf32, #tpu.memory_space<vmem>>, %arg12: memref<32x128xbf16, #tpu.memory_space<vmem>>, %arg13: memref<1x128xf32, #tpu.memory_space<vmem>>, %arg14: memref<128x32xbf16, #tpu.memory_space<vmem>>, %arg15: memref<1x32xf32, #tpu.memory_space<vmem>>, %arg16: memref<32x32xbf16, #tpu.memory_space<vmem>>, %arg17: memref<1x32xf32, #tpu.memory_space<vmem>>, %arg18: memref<1x32x32xf32, #tpu.memory_space<vmem>>) attributes {dimension_semantics = [#tpu.dimension_semantics<parallel>, #tpu.dimension_semantics<parallel>], iteration_bounds = array<i64: 2, 2>, scalar_prefetch = 0 : i64, scratch_operands = 0 : i64, tpu.core_type = #tpu.core_type<tc>, window_params = [{transform_indices = @transform_0, window_bounds = array<i64: 1, 32, 32>}, {transform_indices = @transform_1, window_bounds = array<i64: 1, 1, 32>}, {transform_indices = @transform_2, window_bounds = array<i64: 1, 1, 32>}, {pipeline_mode = #tpu.pipeline_mode<synchronous>, transform_indices = @transform_3, window_bounds = array<i64: 32, 32>}, {pipeline_mode = #tpu.pipeline_mode<synchronous>, transform_indices = @transform_4, window_bounds = array<i64: 1, 32>}, {pipeline_mode = #tpu.pipeline_mode<synchronous>, transform_indices = @transform_5, window_bounds = array<i64: 1, 32>}, {pipeline_mode = #tpu.pipeline_mode<synchronous>, transform_indices = @transform_6, window_bounds = array<i64: 1, 32>}, {pipeline_mode = #tpu.pipeline_mode<synchronous>, transform_indices = @transform_7, window_bounds = array<i64: 1, 32>}, {pipeline_mode = #tpu.pipeline_mode<synchronous>, transform_indices = @transform_8, window_bounds = array<i64: 32, 128>}, {pipeline_mode = #tpu.pipeline_mode<synchronous>, transform_indices = @transform_9, window_bounds = array<i64: 1, 128>}, {pipeline_mode = #tpu.pipeline_mode<synchronous>, transform_indices = @transform_10, window_bounds = array<i64: 32, 128>}, {pipeline_mode = #tpu.pipeline_mode<synchronous>, transform_indices = @transform_11, window_bounds = array<i64: 1, 128>}, {pipeline_mode = #tpu.pipeline_mode<synchronous>, transform_indices = @transform_12, window_bounds = array<i64: 128, 32>}, {pipeline_mode = #tpu.pipeline_mode<synchronous>, transform_indices = @transform_13, window_bounds = array<i64: 1, 32>}, {pipeline_mode = #tpu.pipeline_mode<synchronous>, transform_indices = @transform_14, window_bounds = array<i64: 32, 32>}, {pipeline_mode = #tpu.pipeline_mode<synchronous>, transform_indices = @transform_15, window_bounds = array<i64: 1, 32>}, {transform_indices = @transform_16, window_bounds = array<i64: 1, 32, 32>}]} {
    %c0 = arith.constant 0 : index
    %c0_0 = arith.constant 0 : index
    %c0_1 = arith.constant 0 : index
    %0 = vector.load %arg2[%c0, %c0_0, %c0_1] : memref<1x32x32xf32, #tpu.memory_space<vmem>>, vector<1x32x32xf32>
    %1 = vector.shape_cast %0 : vector<1x32x32xf32> to vector<32x32xf32>
    %c0_2 = arith.constant 0 : index
    %c0_3 = arith.constant 0 : index
    %c0_4 = arith.constant 0 : index
    %2 = vector.load %arg3[%c0_2, %c0_3, %c0_4] : memref<1x1x32xf32, #tpu.memory_space<vmem>>, vector<1x1x32xf32>
    %3 = vector.shape_cast %2 : vector<1x1x32xf32> to vector<1x32xf32>
    %4 = vector.broadcast %3 : vector<1x32xf32> to vector<32x32xf32>
    %5 = arith.mulf %1, %4 : vector<32x32xf32>
    %6 = arith.truncf %5 : vector<32x32xf32> to vector<32x32xbf16>
    %c0_5 = arith.constant 0 : index
    %c0_6 = arith.constant 0 : index
    %7 = vector.load %arg5[%c0_5, %c0_6] : memref<32x32xbf16, #tpu.memory_space<vmem>>, vector<32x32xbf16>
    %cst = arith.constant dense<0.000000e+00> : vector<32x32xf32>
    %8 = tpu.matmul %6, %7, %cst {dimension_numbers = #tpu.dot_dimension_numbers<[1], [0], [0], [1], [0, 0, 1, 1], [], []>} : vector<32x32xbf16>, vector<32x32xbf16>, vector<32x32xf32> -> vector<32x32xf32>
    %c0_7 = arith.constant 0 : index
    %c0_8 = arith.constant 0 : index
    %c0_9 = arith.constant 0 : index
    %9 = vector.load %arg4[%c0_7, %c0_8, %c0_9] : memref<1x1x32xf32, #tpu.memory_space<vmem>>, vector<1x1x32xf32>
    %10 = vector.shape_cast %9 : vector<1x1x32xf32> to vector<1x32xf32>
    %11 = vector.broadcast %10 : vector<1x32xf32> to vector<32x32xf32>
    %12 = arith.addf %8, %11 : vector<32x32xf32>
    %c0_10 = arith.constant 0 : index
    %c0_11 = arith.constant 0 : index
    %13 = vector.load %arg6[%c0_10, %c0_11] : memref<1x32xf32, #tpu.memory_space<vmem>>, vector<1x32xf32>
    %c0_12 = arith.constant 0 : index
    %c0_13 = arith.constant 0 : index
    %14 = vector.load %arg7[%c0_12, %c0_13] : memref<1x32xf32, #tpu.memory_space<vmem>>, vector<1x32xf32>
    %cst_14 = arith.constant dense<0.000000e+00> : vector<32xf32>
    %15 = vector.multi_reduction <add>, %12, %cst_14 [1] : vector<32x32xf32> to vector<32xf32>
    %16 = vector.shape_cast %15 : vector<32xf32> to vector<32x1xf32>
    %cst_15 = arith.constant 3.200000e+01 : f32
    %17 = vector.broadcast %cst_15 : f32 to vector<32x1xf32>
    %18 = arith.divf %16, %17 : vector<32x1xf32>
    %19 = arith.mulf %12, %12 : vector<32x32xf32>
    %cst_16 = arith.constant dense<0.000000e+00> : vector<32xf32>
    %20 = vector.multi_reduction <add>, %19, %cst_16 [1] : vector<32x32xf32> to vector<32xf32>
    %21 = vector.shape_cast %20 : vector<32xf32> to vector<32x1xf32>
    %cst_17 = arith.constant 3.200000e+01 : f32
    %22 = vector.broadcast %cst_17 : f32 to vector<32x1xf32>
    %23 = arith.divf %21, %22 : vector<32x1xf32>
    %24 = arith.mulf %18, %18 : vector<32x1xf32>
    %25 = arith.subf %23, %24 : vector<32x1xf32>
    %cst_18 = arith.constant 0.000000e+00 : f32
    %26 = vector.broadcast %cst_18 : f32 to vector<32x1xf32>
    %27 = arith.maximumf %25, %26 : vector<32x1xf32>
    %cst_19 = arith.constant 9.99999974E-6 : f32
    %28 = vector.broadcast %cst_19 : f32 to vector<32x1xf32>
    %29 = arith.addf %27, %28 : vector<32x1xf32>
    %30 = math.rsqrt %29 : vector<32x1xf32>
    %31 = vector.broadcast %18 : vector<32x1xf32> to vector<32x32xf32>
    %32 = arith.subf %12, %31 : vector<32x32xf32>
    %33 = vector.broadcast %30 : vector<32x1xf32> to vector<32x32xf32>
    %34 = arith.mulf %32, %33 : vector<32x32xf32>
    %35 = vector.broadcast %13 : vector<1x32xf32> to vector<32x32xf32>
    %36 = arith.mulf %34, %35 : vector<32x32xf32>
    %37 = vector.broadcast %14 : vector<1x32xf32> to vector<32x32xf32>
    %38 = arith.addf %36, %37 : vector<32x32xf32>
    %39 = arith.addf %38, %12 : vector<32x32xf32>
    %c0_20 = arith.constant 0 : index
    %c0_21 = arith.constant 0 : index
    %40 = vector.load %arg8[%c0_20, %c0_21] : memref<1x32xf32, #tpu.memory_space<vmem>>, vector<1x32xf32>
    %c0_22 = arith.constant 0 : index
    %c0_23 = arith.constant 0 : index
    %41 = vector.load %arg9[%c0_22, %c0_23] : memref<1x32xf32, #tpu.memory_space<vmem>>, vector<1x32xf32>
    %cst_24 = arith.constant dense<0.000000e+00> : vector<32xf32>
    %42 = vector.multi_reduction <add>, %39, %cst_24 [1] : vector<32x32xf32> to vector<32xf32>
    %43 = vector.shape_cast %42 : vector<32xf32> to vector<32x1xf32>
    %cst_25 = arith.constant 3.200000e+01 : f32
    %44 = vector.broadcast %cst_25 : f32 to vector<32x1xf32>
    %45 = arith.divf %43, %44 : vector<32x1xf32>
    %46 = arith.mulf %39, %39 : vector<32x32xf32>
    %cst_26 = arith.constant dense<0.000000e+00> : vector<32xf32>
    %47 = vector.multi_reduction <add>, %46, %cst_26 [1] : vector<32x32xf32> to vector<32xf32>
    %48 = vector.shape_cast %47 : vector<32xf32> to vector<32x1xf32>
    %cst_27 = arith.constant 3.200000e+01 : f32
    %49 = vector.broadcast %cst_27 : f32 to vector<32x1xf32>
    %50 = arith.divf %48, %49 : vector<32x1xf32>
    %51 = arith.mulf %45, %45 : vector<32x1xf32>
    %52 = arith.subf %50, %51 : vector<32x1xf32>
    %cst_28 = arith.constant 0.000000e+00 : f32
    %53 = vector.broadcast %cst_28 : f32 to vector<32x1xf32>
    %54 = arith.maximumf %52, %53 : vector<32x1xf32>
    %cst_29 = arith.constant 9.99999974E-6 : f32
    %55 = vector.broadcast %cst_29 : f32 to vector<32x1xf32>
    %56 = arith.addf %54, %55 : vector<32x1xf32>
    %57 = math.rsqrt %56 : vector<32x1xf32>
    %58 = vector.broadcast %45 : vector<32x1xf32> to vector<32x32xf32>
    %59 = arith.subf %39, %58 : vector<32x32xf32>
    %60 = vector.broadcast %57 : vector<32x1xf32> to vector<32x32xf32>
    %61 = arith.mulf %59, %60 : vector<32x32xf32>
    %62 = vector.broadcast %40 : vector<1x32xf32> to vector<32x32xf32>
    %63 = arith.mulf %61, %62 : vector<32x32xf32>
    %64 = vector.broadcast %41 : vector<1x32xf32> to vector<32x32xf32>
    %65 = arith.addf %63, %64 : vector<32x32xf32>
    %66 = arith.addf %65, %39 : vector<32x32xf32>
    %cst_30 = arith.constant dense<0.000000e+00> : vector<32xf32>
    %67 = vector.multi_reduction <add>, %66, %cst_30 [1] : vector<32x32xf32> to vector<32xf32>
    %68 = vector.shape_cast %67 : vector<32xf32> to vector<32x1xf32>
    %cst_31 = arith.constant 3.200000e+01 : f32
    %69 = vector.broadcast %cst_31 : f32 to vector<32x1xf32>
    %70 = arith.divf %68, %69 : vector<32x1xf32>
    %71 = arith.mulf %66, %66 : vector<32x32xf32>
    %cst_32 = arith.constant dense<0.000000e+00> : vector<32xf32>
    %72 = vector.multi_reduction <add>, %71, %cst_32 [1] : vector<32x32xf32> to vector<32xf32>
    %73 = vector.shape_cast %72 : vector<32xf32> to vector<32x1xf32>
    %cst_33 = arith.constant 3.200000e+01 : f32
    %74 = vector.broadcast %cst_33 : f32 to vector<32x1xf32>
    %75 = arith.divf %73, %74 : vector<32x1xf32>
    %76 = arith.mulf %70, %70 : vector<32x1xf32>
    %77 = arith.subf %75, %76 : vector<32x1xf32>
    %cst_34 = arith.constant 0.000000e+00 : f32
    %78 = vector.broadcast %cst_34 : f32 to vector<32x1xf32>
    %79 = arith.maximumf %77, %78 : vector<32x1xf32>
    %cst_35 = arith.constant 9.99999974E-6 : f32
    %80 = vector.broadcast %cst_35 : f32 to vector<32x1xf32>
    %81 = arith.addf %79, %80 : vector<32x1xf32>
    %82 = math.rsqrt %81 : vector<32x1xf32>
    %83 = vector.broadcast %70 : vector<32x1xf32> to vector<32x32xf32>
    %84 = arith.subf %66, %83 : vector<32x32xf32>
    %85 = vector.broadcast %82 : vector<32x1xf32> to vector<32x32xf32>
    %86 = arith.mulf %84, %85 : vector<32x32xf32>
    %87 = arith.truncf %86 : vector<32x32xf32> to vector<32x32xbf16>
    %c0_36 = arith.constant 0 : index
    %c0_37 = arith.constant 0 : index
    %88 = vector.load %arg10[%c0_36, %c0_37] : memref<32x128xbf16, #tpu.memory_space<vmem>>, vector<32x128xbf16>
    %cst_38 = arith.constant dense<0.000000e+00> : vector<32x128xf32>
    %89 = tpu.matmul %87, %88, %cst_38 {dimension_numbers = #tpu.dot_dimension_numbers<[1], [0], [0], [1], [0, 0, 1, 1], [], []>} : vector<32x32xbf16>, vector<32x128xbf16>, vector<32x128xf32> -> vector<32x128xf32>
    %c0_39 = arith.constant 0 : index
    %c0_40 = arith.constant 0 : index
    %90 = vector.load %arg11[%c0_39, %c0_40] : memref<1x128xf32, #tpu.memory_space<vmem>>, vector<1x128xf32>
    %91 = vector.broadcast %90 : vector<1x128xf32> to vector<32x128xf32>
    %92 = arith.addf %89, %91 : vector<32x128xf32>
    %c0_41 = arith.constant 0 : index
    %c0_42 = arith.constant 0 : index
    %93 = vector.load %arg12[%c0_41, %c0_42] : memref<32x128xbf16, #tpu.memory_space<vmem>>, vector<32x128xbf16>
    %cst_43 = arith.constant dense<0.000000e+00> : vector<32x128xf32>
    %94 = tpu.matmul %87, %93, %cst_43 {dimension_numbers = #tpu.dot_dimension_numbers<[1], [0], [0], [1], [0, 0, 1, 1], [], []>} : vector<32x32xbf16>, vector<32x128xbf16>, vector<32x128xf32> -> vector<32x128xf32>
    %c0_44 = arith.constant 0 : index
    %c0_45 = arith.constant 0 : index
    %95 = vector.load %arg13[%c0_44, %c0_45] : memref<1x128xf32, #tpu.memory_space<vmem>>, vector<1x128xf32>
    %96 = vector.broadcast %95 : vector<1x128xf32> to vector<32x128xf32>
    %97 = arith.addf %94, %96 : vector<32x128xf32>
    %cst_46 = arith.constant 5.000000e-01 : f32
    %98 = vector.broadcast %cst_46 : f32 to vector<32x128xf32>
    %99 = arith.mulf %98, %97 : vector<32x128xf32>
    %cst_47 = arith.constant 0.707106769 : f32
    %100 = vector.broadcast %cst_47 : f32 to vector<32x128xf32>
    %101 = arith.mulf %97, %100 : vector<32x128xf32>
    %102 = math.absf %101 : vector<32x128xf32>
    %cst_48 = arith.constant 5.000000e-01 : f32
    %103 = vector.broadcast %cst_48 : f32 to vector<32x128xf32>
    %104 = arith.mulf %103, %102 : vector<32x128xf32>
    %cst_49 = arith.constant 1.000000e+00 : f32
    %105 = vector.broadcast %cst_49 : f32 to vector<32x128xf32>
    %106 = arith.addf %105, %104 : vector<32x128xf32>
    %107 = tpu.reciprocal %106 {approx = true} : vector<32x128xf32> -> vector<32x128xf32>
    %cst_50 = arith.constant 0.170872763 : f32
    %108 = vector.broadcast %cst_50 : f32 to vector<32x128xf32>
    %109 = arith.mulf %107, %108 : vector<32x128xf32>
    %cst_51 = arith.constant -0.822152256 : f32
    %110 = vector.broadcast %cst_51 : f32 to vector<32x128xf32>
    %111 = arith.addf %110, %109 : vector<32x128xf32>
    %112 = arith.mulf %107, %111 : vector<32x128xf32>
    %cst_52 = arith.constant 1.48851585 : f32
    %113 = vector.broadcast %cst_52 : f32 to vector<32x128xf32>
    %114 = arith.addf %113, %112 : vector<32x128xf32>
    %115 = arith.mulf %107, %114 : vector<32x128xf32>
    %cst_53 = arith.constant -1.13520396 : f32
    %116 = vector.broadcast %cst_53 : f32 to vector<32x128xf32>
    %117 = arith.addf %116, %115 : vector<32x128xf32>
    %118 = arith.mulf %107, %117 : vector<32x128xf32>
    %cst_54 = arith.constant 0.278868079 : f32
    %119 = vector.broadcast %cst_54 : f32 to vector<32x128xf32>
    %120 = arith.addf %119, %118 : vector<32x128xf32>
    %121 = arith.mulf %107, %120 : vector<32x128xf32>
    %cst_55 = arith.constant -0.186288059 : f32
    %122 = vector.broadcast %cst_55 : f32 to vector<32x128xf32>
    %123 = arith.addf %122, %121 : vector<32x128xf32>
    %124 = arith.mulf %107, %123 : vector<32x128xf32>
    %cst_56 = arith.constant 0.0967841818 : f32
    %125 = vector.broadcast %cst_56 : f32 to vector<32x128xf32>
    %126 = arith.addf %125, %124 : vector<32x128xf32>
    %127 = arith.mulf %107, %126 : vector<32x128xf32>
    %cst_57 = arith.constant 0.374091953 : f32
    %128 = vector.broadcast %cst_57 : f32 to vector<32x128xf32>
    %129 = arith.addf %128, %127 : vector<32x128xf32>
    %130 = arith.mulf %107, %129 : vector<32x128xf32>
    %cst_58 = arith.constant 1.00002372 : f32
    %131 = vector.broadcast %cst_58 : f32 to vector<32x128xf32>
    %132 = arith.addf %131, %130 : vector<32x128xf32>
    %133 = arith.mulf %107, %132 : vector<32x128xf32>
    %cst_59 = arith.constant -1.26551223 : f32
    %134 = vector.broadcast %cst_59 : f32 to vector<32x128xf32>
    %135 = arith.addf %134, %133 : vector<32x128xf32>
    %cst_60 = arith.constant 0.000000e+00 : f32
    %136 = vector.broadcast %cst_60 : f32 to vector<32x128xf32>
    %137 = arith.subf %136, %102 : vector<32x128xf32>
    %138 = arith.mulf %137, %102 : vector<32x128xf32>
    %139 = arith.addf %138, %135 : vector<32x128xf32>
    %140 = math.exp %139 : vector<32x128xf32>
    %141 = arith.mulf %107, %140 : vector<32x128xf32>
    %cst_61 = arith.constant 1.000000e+00 : f32
    %142 = vector.broadcast %cst_61 : f32 to vector<32x128xf32>
    %143 = arith.subf %142, %141 : vector<32x128xf32>
    %cst_62 = arith.constant 0.000000e+00 : f32
    %144 = vector.broadcast %cst_62 : f32 to vector<32x128xf32>
    %145 = arith.cmpf oge, %101, %144 : vector<32x128xf32>
    %cst_63 = arith.constant 0.000000e+00 : f32
    %146 = vector.broadcast %cst_63 : f32 to vector<32x128xf32>
    %147 = arith.subf %146, %143 : vector<32x128xf32>
    %148 = arith.select %145, %143, %147 : vector<32x128xi1>, vector<32x128xf32>
    %cst_64 = arith.constant 1.000000e+00 : f32
    %149 = vector.broadcast %cst_64 : f32 to vector<32x128xf32>
    %150 = arith.addf %149, %148 : vector<32x128xf32>
    %151 = arith.mulf %99, %150 : vector<32x128xf32>
    %152 = arith.mulf %92, %151 : vector<32x128xf32>
    %153 = arith.truncf %152 : vector<32x128xf32> to vector<32x128xbf16>
    %c0_65 = arith.constant 0 : index
    %c0_66 = arith.constant 0 : index
    %154 = vector.load %arg14[%c0_65, %c0_66] : memref<128x32xbf16, #tpu.memory_space<vmem>>, vector<128x32xbf16>
    %cst_67 = arith.constant dense<0.000000e+00> : vector<32x32xf32>
    %155 = tpu.matmul %153, %154, %cst_67 {dimension_numbers = #tpu.dot_dimension_numbers<[1], [0], [0], [1], [0, 0, 1, 1], [], []>} : vector<32x128xbf16>, vector<128x32xbf16>, vector<32x32xf32> -> vector<32x32xf32>
    %c0_68 = arith.constant 0 : index
    %c0_69 = arith.constant 0 : index
    %156 = vector.load %arg15[%c0_68, %c0_69] : memref<1x32xf32, #tpu.memory_space<vmem>>, vector<1x32xf32>
    %157 = vector.broadcast %156 : vector<1x32xf32> to vector<32x32xf32>
    %158 = arith.addf %155, %157 : vector<32x32xf32>
    %159 = arith.addf %158, %66 : vector<32x32xf32>
    %160 = arith.truncf %159 : vector<32x32xf32> to vector<32x32xbf16>
    %c0_70 = arith.constant 0 : index
    %c0_71 = arith.constant 0 : index
    %161 = vector.load %arg16[%c0_70, %c0_71] : memref<32x32xbf16, #tpu.memory_space<vmem>>, vector<32x32xbf16>
    %cst_72 = arith.constant dense<0.000000e+00> : vector<32x32xf32>
    %162 = tpu.matmul %160, %161, %cst_72 {dimension_numbers = #tpu.dot_dimension_numbers<[1], [0], [0], [1], [0, 0, 1, 1], [], []>} : vector<32x32xbf16>, vector<32x32xbf16>, vector<32x32xf32> -> vector<32x32xf32>
    %c0_73 = arith.constant 0 : index
    %c0_74 = arith.constant 0 : index
    %163 = vector.load %arg17[%c0_73, %c0_74] : memref<1x32xf32, #tpu.memory_space<vmem>>, vector<1x32xf32>
    %164 = vector.broadcast %163 : vector<1x32xf32> to vector<32x32xf32>
    %165 = arith.addf %162, %164 : vector<32x32xf32>
    %166 = arith.addf %165, %1 : vector<32x32xf32>
    %c0_75 = arith.constant 0 : index
    %c0_76 = arith.constant 0 : index
    %c0_77 = arith.constant 0 : index
    %167 = vector.load %arg18[%c0_75, %c0_76, %c0_77] : memref<1x32x32xf32, #tpu.memory_space<vmem>>, vector<1x32x32xf32>
    %168 = vector.shape_cast %167 : vector<1x32x32xf32> to vector<32x32xf32>
    %169 = vector.shape_cast %166 : vector<32x32xf32> to vector<1x32x32xf32>
    tpu.vector_store %arg18[%c0_75, %c0_76, %c0_77], %169 {strides = array<i32>} : memref<1x32x32xf32, #tpu.memory_space<vmem>>, vector<1x32x32xf32>,
    return
  }
  func.func @transform_0(%arg0: i32, %arg1: i32) -> (i32, i32, i32) {
    %c0_i32 = arith.constant 0 : i32
    %c0_i32_0 = arith.constant 0 : i32
    return %arg0, %arg1, %c0_i32 : i32, i32, i32
  }
  func.func @transform_1(%arg0: i32, %arg1: i32) -> (i32, i32, i32) {
    %c0_i32 = arith.constant 0 : i32
    %c0_i32_0 = arith.constant 0 : i32
    %c0_i32_1 = arith.constant 0 : i32
    return %arg0, %c0_i32, %c0_i32_0 : i32, i32, i32
  }
  func.func @transform_2(%arg0: i32, %arg1: i32) -> (i32, i32, i32) {
    %c0_i32 = arith.constant 0 : i32
    %c0_i32_0 = arith.constant 0 : i32
    %c0_i32_1 = arith.constant 0 : i32
    return %arg0, %c0_i32, %c0_i32_0 : i32, i32, i32
  }
  func.func @transform_3(%arg0: i32, %arg1: i32) -> (i32, i32) {
    %c0_i32 = arith.constant 0 : i32
    %c0_i32_0 = arith.constant 0 : i32
    %c0_i32_1 = arith.constant 0 : i32
    return %c0_i32, %c0_i32_0 : i32, i32
  }
  func.func @transform_4(%arg0: i32, %arg1: i32) -> (i32, i32) {
    %c0_i32 = arith.constant 0 : i32
    %c0_i32_0 = arith.constant 0 : i32
    %c0_i32_1 = arith.constant 0 : i32
    return %c0_i32, %c0_i32_0 : i32, i32
  }
  func.func @transform_5(%arg0: i32, %arg1: i32) -> (i32, i32) {
    %c0_i32 = arith.constant 0 : i32
    %c0_i32_0 = arith.constant 0 : i32
    %c0_i32_1 = arith.constant 0 : i32
    return %c0_i32, %c0_i32_0 : i32, i32
  }
  func.func @transform_6(%arg0: i32, %arg1: i32) -> (i32, i32) {
    %c0_i32 = arith.constant 0 : i32
    %c0_i32_0 = arith.constant 0 : i32
    %c0_i32_1 = arith.constant 0 : i32
    return %c0_i32, %c0_i32_0 : i32, i32
  }
  func.func @transform_7(%arg0: i32, %arg1: i32) -> (i32, i32) {
    %c0_i32 = arith.constant 0 : i32
    %c0_i32_0 = arith.constant 0 : i32
    %c0_i32_1 = arith.constant 0 : i32
    return %c0_i32, %c0_i32_0 : i32, i32
  }
  func.func @transform_8(%arg0: i32, %arg1: i32) -> (i32, i32) {
    %c0_i32 = arith.constant 0 : i32
    %c0_i32_0 = arith.constant 0 : i32
    %c0_i32_1 = arith.constant 0 : i32
    return %c0_i32, %c0_i32_0 : i32, i32
  }
  func.func @transform_9(%arg0: i32, %arg1: i32) -> (i32, i32) {
    %c0_i32 = arith.constant 0 : i32
    %c0_i32_0 = arith.constant 0 : i32
    %c0_i32_1 = arith.constant 0 : i32
    return %c0_i32, %c0_i32_0 : i32, i32
  }
  func.func @transform_10(%arg0: i32, %arg1: i32) -> (i32, i32) {
    %c0_i32 = arith.constant 0 : i32
    %c0_i32_0 = arith.constant 0 : i32
    %c0_i32_1 = arith.constant 0 : i32
    return %c0_i32, %c0_i32_0 : i32, i32
  }
  func.func @transform_11(%arg0: i32, %arg1: i32) -> (i32, i32) {
    %c0_i32 = arith.constant 0 : i32
    %c0_i32_0 = arith.constant 0 : i32
    %c0_i32_1 = arith.constant 0 : i32
    return %c0_i32, %c0_i32_0 : i32, i32
  }
  func.func @transform_12(%arg0: i32, %arg1: i32) -> (i32, i32) {
    %c0_i32 = arith.constant 0 : i32
    %c0_i32_0 = arith.constant 0 : i32
    %c0_i32_1 = arith.constant 0 : i32
    return %c0_i32, %c0_i32_0 : i32, i32
  }
  func.func @transform_13(%arg0: i32, %arg1: i32) -> (i32, i32) {
    %c0_i32 = arith.constant 0 : i32
    %c0_i32_0 = arith.constant 0 : i32
    %c0_i32_1 = arith.constant 0 : i32
    return %c0_i32, %c0_i32_0 : i32, i32
  }
  func.func @transform_14(%arg0: i32, %arg1: i32) -> (i32, i32) {
    %c0_i32 = arith.constant 0 : i32
    %c0_i32_0 = arith.constant 0 : i32
    %c0_i32_1 = arith.constant 0 : i32
    return %c0_i32, %c0_i32_0 : i32, i32
  }
  func.func @transform_15(%arg0: i32, %arg1: i32) -> (i32, i32) {
    %c0_i32 = arith.constant 0 : i32
    %c0_i32_0 = arith.constant 0 : i32
    %c0_i32_1 = arith.constant 0 : i32
    return %c0_i32, %c0_i32_0 : i32, i32
  }
  func.func @transform_16(%arg0: i32, %arg1: i32) -> (i32, i32, i32) {
    %c0_i32 = arith.constant 0 : i32
    %c0_i32_0 = arith.constant 0 : i32
    return %arg0, %arg1, %c0_i32 : i32, i32, i32
  }
}

</mosaic_0001>

<llo_original>
// kernel: tpu_custom_call.1
$region0: #{tpu_custom_call.1}
  #allocation0 [shape = 'u32[]', space=smem, size = 0x4, offset = 0x4, fixed_abs, tag = 'smem constant byte address 0x4 - core index']
  #allocation1 [shape = 'u32[144,128]{1,0:T(1,128)}', space=vmem, size = 0x12000, scoped, tag = 'internal scratch']
  %s0 = inlined_call_operand.vmem [shape: f32[2,64,32], index: 0, kind: input, shape index: {}]
  %s1 = inlined_call_operand.vmem [shape: f32[2,1,32], index: 1, kind: input, shape index: {}]
  %s2 = inlined_call_operand.vmem [shape: f32[2,1,32], index: 2, kind: input, shape index: {}]
  %s3 = inlined_call_operand.vmem [shape: bf16[32,32], index: 3, kind: input, shape index: {}]
  %s4 = inlined_call_operand.vmem [shape: f32[1,32], index: 4, kind: input, shape index: {}]
  %s5 = inlined_call_operand.vmem [shape: f32[1,32], index: 5, kind: input, shape index: {}]
  %s6 = inlined_call_operand.vmem [shape: f32[1,32], index: 6, kind: input, shape index: {}]
  %s7 = inlined_call_operand.vmem [shape: f32[1,32], index: 7, kind: input, shape index: {}]
  %s8 = inlined_call_operand.vmem [shape: bf16[32,128], index: 8, kind: input, shape index: {}]
  %s9 = inlined_call_operand.vmem [shape: f32[1,128], index: 9, kind: input, shape index: {}]
  %s10 = inlined_call_operand.vmem [shape: bf16[32,128], index: 10, kind: input, shape index: {}]
  %s11 = inlined_call_operand.vmem [shape: f32[1,128], index: 11, kind: input, shape index: {}]
  %s12 = inlined_call_operand.vmem [shape: bf16[128,32], index: 12, kind: input, shape index: {}]
  %s13 = inlined_call_operand.vmem [shape: f32[1,32], index: 13, kind: input, shape index: {}]
  %s14 = inlined_call_operand.vmem [shape: bf16[32,32], index: 14, kind: input, shape index: {}]
  %s15 = inlined_call_operand.vmem [shape: f32[1,32], index: 15, kind: input, shape index: {}]
  %s16 = inlined_call_operand.vmem [shape: f32[2,64,32], index: 16, kind: output, shape index: {}]
  %s17 = sld [smem:[#allocation0]]
  $region97: #{tpu_custom_call.1} parent=0
    _
  %s19 = ssub.s32 1, %s17
  %s20 = scalar_select 0, %s19, %s17
  loop: start=0, step=1, limit=6
  $region2: #{tpu_custom_call.1} parent=0 // loop_pre_header
    _
  $region3: #{tpu_custom_call.1} parent=0 // loop_header
    %s22 = sphi 0, %s26
    %p23 = scmp.ge.s32.totalorder %s22, 6
    %s29 = sphi 0, %s41
    %s30 = sphi 0, %s37
    %s31 = sphi 0, %s29
    %s32 = sphi 0, %s30
    %s33 = sphi 0, %s31
    %s34 = sphi 0, %s32
    %s46 = sphi 0, %s48
    %s49 = sphi 0, %s46
    %s50 = sphi 0, %s49
    %s66 = sphi 0, %s50
    %s72 = sphi 0, %s74
    %s75 = sphi 0, %s72
    %s76 = sphi 0, %s75
    %s92 = sphi 0, %s76
    %s98 = sphi 0, %s100
    %s101 = sphi 0, %s98
    %s102 = sphi 0, %s101
    %s118 = sphi 0, %s102
    %s122 = sphi 0, %s122
    %s124 = sphi 0, %s122
    %s125 = sphi 0, %s124
    %s139 = sphi 0, %s125
    %s143 = sphi 0, %s143
    %s145 = sphi 0, %s143
    %s146 = sphi 0, %s145
    %s160 = sphi 0, %s146
    %s164 = sphi 0, %s164
    %s166 = sphi 0, %s164
    %s167 = sphi 0, %s166
    %s181 = sphi 0, %s167
    %s185 = sphi 0, %s185
    %s187 = sphi 0, %s185
    %s188 = sphi 0, %s187
    %s202 = sphi 0, %s188
    %s206 = sphi 0, %s206
    %s208 = sphi 0, %s206
    %s209 = sphi 0, %s208
    %s223 = sphi 0, %s209
    %s227 = sphi 0, %s227
    %s229 = sphi 0, %s227
    %s230 = sphi 0, %s229
    %s244 = sphi 0, %s230
    %s248 = sphi 0, %s248
    %s250 = sphi 0, %s248
    %s251 = sphi 0, %s250
    %s265 = sphi 0, %s251
    %s269 = sphi 0, %s269
    %s271 = sphi 0, %s269
    %s272 = sphi 0, %s271
    %s286 = sphi 0, %s272
    %s290 = sphi 0, %s290
    %s292 = sphi 0, %s290
    %s293 = sphi 0, %s292
    %s307 = sphi 0, %s293
    %s311 = sphi 0, %s311
    %s313 = sphi 0, %s311
    %s314 = sphi 0, %s313
    %s328 = sphi 0, %s314
    %s332 = sphi 0, %s332
    %s334 = sphi 0, %s332
    %s335 = sphi 0, %s334
    %s349 = sphi 0, %s335
    %s353 = sphi 0, %s353
    %s355 = sphi 0, %s353
    %s356 = sphi 0, %s355
    %s370 = sphi 0, %s356
    %s374 = sphi 0, %s374
    %s376 = sphi 0, %s374
    %s377 = sphi 0, %s376
    %s391 = sphi 0, %s377
    %s399 = sphi 0, %s401
    %s402 = sphi 0, %s399
    %s403 = sphi 0, %s402
    %s419 = sphi 0, %s403
  $region4: #{tpu_custom_call.1} parent=0 // loop_header_branch
    %25 = sbr.rel (%p23) target = $region8
  $region5: #{tpu_custom_call.1} parent=0 // loop_body
    %s27 = ssub.s32 %s22, 1
    %s28 = ssub.s32 %s22, 2
    %s35 = sadd.s32 1, %s30
    %p36 = scmp.ge.s32.totalorder %s35, 2
    %s37 = scalar_select %p36, 0, %s35
    %s38 = sadd.s32 1, %s29
    %s39 = scalar_select %p36, %s38, %s29
    %p40 = scmp.ge.s32.totalorder %s39, 2
    %s41 = scalar_select %p40, 0, %s39
    %s42 = ssub.s32 %s29, %s41
    %s43 = ssub.s32 %s30, %s37
    %s44 = sor.u32 %s42, %s43
    %p45 = scmp.eq.s32.totalorder %s44, 0
    %s47 = sadd.s32 %s46, 1
    %s48 = scalar_select %p45, %s46, %s47
    %p51 = pneg %p45
    %p52 = scmp.eq.s32.totalorder %s22, 3
    %p53 = por %p51, %p52
    %p54 = scmp.ne.s32.totalorder %s46, %s49
    %p55 = scmp.eq.s32.totalorder %s22, 0
    %p56 = por %p54, %p55
    %p57 = scmp.ne.s32.totalorder %s46, %s49
    %p58 = scmp.eq.s32.totalorder %s27, 3
    %p59 = por %p57, %p58
    %p60 = scmp.ne.s32.totalorder %s49, %s50
    %p61 = scmp.eq.s32.totalorder %s27, 0
    %p62 = por %p60, %p61
    %p63 = scmp.ne.s32.totalorder %s49, %s50
    %p64 = scmp.eq.s32.totalorder %s28, 3
    %p65 = por %p63, %p64
    %p67 = scmp.ne.s32.totalorder %s50, %s66
    %p68 = scmp.eq.s32.totalorder %s28, 0
    %p69 = por %p67, %p68
    %s70 = ssub.s32 %s29, %s41
    %p71 = scmp.eq.s32.totalorder %s70, 0
    %s73 = sadd.s32 %s72, 1
    %s74 = scalar_select %p71, %s72, %s73
    %p77 = pneg %p71
    %p78 = scmp.eq.s32.totalorder %s22, 3
    %p79 = por %p77, %p78
    %p80 = scmp.ne.s32.totalorder %s72, %s75
    %p81 = scmp.eq.s32.totalorder %s22, 0
    %p82 = por %p80, %p81
    %p83 = scmp.ne.s32.totalorder %s72, %s75
    %p84 = scmp.eq.s32.totalorder %s27, 3
    %p85 = por %p83, %p84
    %p86 = scmp.ne.s32.totalorder %s75, %s76
    %p87 = scmp.eq.s32.totalorder %s27, 0
    %p88 = por %p86, %p87
    %p89 = scmp.ne.s32.totalorder %s75, %s76
    %p90 = scmp.eq.s32.totalorder %s28, 3
    %p91 = por %p89, %p90
    %p93 = scmp.ne.s32.totalorder %s76, %s92
    %p94 = scmp.eq.s32.totalorder %s28, 0
    %p95 = por %p93, %p94
    %s96 = ssub.s32 %s29, %s41
    %p97 = scmp.eq.s32.totalorder %s96, 0
    %s99 = sadd.s32 %s98, 1
    %s100 = scalar_select %p97, %s98, %s99
    %p103 = pneg %p97
    %p104 = scmp.eq.s32.totalorder %s22, 3
    %p105 = por %p103, %p104
    %p106 = scmp.ne.s32.totalorder %s98, %s101
    %p107 = scmp.eq.s32.totalorder %s22, 0
    %p108 = por %p106, %p107
    %p109 = scmp.ne.s32.totalorder %s98, %s101
    %p110 = scmp.eq.s32.totalorder %s27, 3
    %p111 = por %p109, %p110
    %p112 = scmp.ne.s32.totalorder %s101, %s102
    %p113 = scmp.eq.s32.totalorder %s27, 0
    %p114 = por %p112, %p113
    %p115 = scmp.ne.s32.totalorder %s101, %s102
    %p116 = scmp.eq.s32.totalorder %s28, 3
    %p117 = por %p115, %p116
    %p119 = scmp.ne.s32.totalorder %s102, %s118
    %p120 = scmp.eq.s32.totalorder %s28, 0
    %p121 = por %p119, %p120
    %s123 = sadd.s32 %s122, 1
    %p126 = scmp.eq.s32.totalorder %s22, 3
    %p127 = scmp.ne.s32.totalorder %s122, %s124
    %p128 = scmp.eq.s32.totalorder %s22, 0
    %p129 = por %p127, %p128
    %p130 = scmp.ne.s32.totalorder %s122, %s124
    %p131 = scmp.eq.s32.totalorder %s27, 3
    %p132 = por %p130, %p131
    %p133 = scmp.ne.s32.totalorder %s124, %s125
    %p134 = scmp.eq.s32.totalorder %s27, 0
    %p135 = por %p133, %p134
    %p136 = scmp.ne.s32.totalorder %s124, %s125
    %p137 = scmp.eq.s32.totalorder %s28, 3
    %p138 = por %p136, %p137
    %p140 = scmp.ne.s32.totalorder %s125, %s139
    %p141 = scmp.eq.s32.totalorder %s28, 0
    %p142 = por %p140, %p141
    %s144 = sadd.s32 %s143, 1
    %p147 = scmp.eq.s32.totalorder %s22, 3
    %p148 = scmp.ne.s32.totalorder %s143, %s145
    %p149 = scmp.eq.s32.totalorder %s22, 0
    %p150 = por %p148, %p149
    %p151 = scmp.ne.s32.totalorder %s143, %s145
    %p152 = scmp.eq.s32.totalorder %s27, 3
    %p153 = por %p151, %p152
    %p154 = scmp.ne.s32.totalorder %s145, %s146
    %p155 = scmp.eq.s32.totalorder %s27, 0
    %p156 = por %p154, %p155
    %p157 = scmp.ne.s32.totalorder %s145, %s146
    %p158 = scmp.eq.s32.totalorder %s28, 3
    %p159 = por %p157, %p158
    %p161 = scmp.ne.s32.totalorder %s146, %s160
    %p162 = scmp.eq.s32.totalorder %s28, 0
    %p163 = por %p161, %p162
    %s165 = sadd.s32 %s164, 1
    %p168 = scmp.eq.s32.totalorder %s22, 3
    %p169 = scmp.ne.s32.totalorder %s164, %s166
    %p170 = scmp.eq.s32.totalorder %s22, 0
    %p171 = por %p169, %p170
    %p172 = scmp.ne.s32.totalorder %s164, %s166
    %p173 = scmp.eq.s32.totalorder %s27, 3
    %p174 = por %p172, %p173
    %p175 = scmp.ne.s32.totalorder %s166, %s167
    %p176 = scmp.eq.s32.totalorder %s27, 0
    %p177 = por %p175, %p176
    %p178 = scmp.ne.s32.totalorder %s166, %s167
    %p179 = scmp.eq.s32.totalorder %s28, 3
    %p180 = por %p178, %p179
    %p182 = scmp.ne.s32.totalorder %s167, %s181
    %p183 = scmp.eq.s32.totalorder %s28, 0
    %p184 = por %p182, %p183
    %s186 = sadd.s32 %s185, 1
    %p189 = scmp.eq.s32.totalorder %s22, 3
    %p190 = scmp.ne.s32.totalorder %s185, %s187
    %p191 = scmp.eq.s32.totalorder %s22, 0
    %p192 = por %p190, %p191
    %p193 = scmp.ne.s32.totalorder %s185, %s187
    %p194 = scmp.eq.s32.totalorder %s27, 3
    %p195 = por %p193, %p194
    %p196 = scmp.ne.s32.totalorder %s187, %s188
    %p197 = scmp.eq.s32.totalorder %s27, 0
    %p198 = por %p196, %p197
    %p199 = scmp.ne.s32.totalorder %s187, %s188
    %p200 = scmp.eq.s32.totalorder %s28, 3
    %p201 = por %p199, %p200
    %p203 = scmp.ne.s32.totalorder %s188, %s202
    %p204 = scmp.eq.s32.totalorder %s28, 0
    %p205 = por %p203, %p204
    %s207 = sadd.s32 %s206, 1
    %p210 = scmp.eq.s32.totalorder %s22, 3
    %p211 = scmp.ne.s32.totalorder %s206, %s208
    %p212 = scmp.eq.s32.totalorder %s22, 0
    %p213 = por %p211, %p212
    %p214 = scmp.ne.s32.totalorder %s206, %s208
    %p215 = scmp.eq.s32.totalorder %s27, 3
    %p216 = por %p214, %p215
    %p217 = scmp.ne.s32.totalorder %s208, %s209
    %p218 = scmp.eq.s32.totalorder %s27, 0
    %p219 = por %p217, %p218
    %p220 = scmp.ne.s32.totalorder %s208, %s209
    %p221 = scmp.eq.s32.totalorder %s28, 3
    %p222 = por %p220, %p221
    %p224 = scmp.ne.s32.totalorder %s209, %s223
    %p225 = scmp.eq.s32.totalorder %s28, 0
    %p226 = por %p224, %p225
    %s228 = sadd.s32 %s227, 1
    %p231 = scmp.eq.s32.totalorder %s22, 3
    %p232 = scmp.ne.s32.totalorder %s227, %s229
    %p233 = scmp.eq.s32.totalorder %s22, 0
    %p234 = por %p232, %p233
    %p235 = scmp.ne.s32.totalorder %s227, %s229
    %p236 = scmp.eq.s32.totalorder %s27, 3
    %p237 = por %p235, %p236
    %p238 = scmp.ne.s32.totalorder %s229, %s230
    %p239 = scmp.eq.s32.totalorder %s27, 0
    %p240 = por %p238, %p239
    %p241 = scmp.ne.s32.totalorder %s229, %s230
    %p242 = scmp.eq.s32.totalorder %s28, 3
    %p243 = por %p241, %p242
    %p245 = scmp.ne.s32.totalorder %s230, %s244
    %p246 = scmp.eq.s32.totalorder %s28, 0
    %p247 = por %p245, %p246
    %s249 = sadd.s32 %s248, 1
    %p252 = scmp.eq.s32.totalorder %s22, 3
    %p253 = scmp.ne.s32.totalorder %s248, %s250
    %p254 = scmp.eq.s32.totalorder %s22, 0
    %p255 = por %p253, %p254
    %p256 = scmp.ne.s32.totalorder %s248, %s250
    %p257 = scmp.eq.s32.totalorder %s27, 3
    %p258 = por %p256, %p257
    %p259 = scmp.ne.s32.totalorder %s250, %s251
    %p260 = scmp.eq.s32.totalorder %s27, 0
    %p261 = por %p259, %p260
    %p262 = scmp.ne.s32.totalorder %s250, %s251
    %p263 = scmp.eq.s32.totalorder %s28, 3
    %p264 = por %p262, %p263
    %p266 = scmp.ne.s32.totalorder %s251, %s265
    %p267 = scmp.eq.s32.totalorder %s28, 0
    %p268 = por %p266, %p267
    %s270 = sadd.s32 %s269, 1
    %p273 = scmp.eq.s32.totalorder %s22, 3
    %p274 = scmp.ne.s32.totalorder %s269, %s271
    %p275 = scmp.eq.s32.totalorder %s22, 0
    %p276 = por %p274, %p275
    %p277 = scmp.ne.s32.totalorder %s269, %s271
    %p278 = scmp.eq.s32.totalorder %s27, 3
    %p279 = por %p277, %p278
    %p280 = scmp.ne.s32.totalorder %s271, %s272
    %p281 = scmp.eq.s32.totalorder %s27, 0
    %p282 = por %p280, %p281
    %p283 = scmp.ne.s32.totalorder %s271, %s272
    %p284 = scmp.eq.s32.totalorder %s28, 3
    %p285 = por %p283, %p284
    %p287 = scmp.ne.s32.totalorder %s272, %s286
    %p288 = scmp.eq.s32.totalorder %s28, 0
    %p289 = por %p287, %p288
    %s291 = sadd.s32 %s290, 1
    %p294 = scmp.eq.s32.totalorder %s22, 3
    %p295 = scmp.ne.s32.totalorder %s290, %s292
    %p296 = scmp.eq.s32.totalorder %s22, 0
    %p297 = por %p295, %p296
    %p298 = scmp.ne.s32.totalorder %s290, %s292
    %p299 = scmp.eq.s32.totalorder %s27, 3
    %p300 = por %p298, %p299
    %p301 = scmp.ne.s32.totalorder %s292, %s293
    %p302 = scmp.eq.s32.totalorder %s27, 0
    %p303 = por %p301, %p302
    %p304 = scmp.ne.s32.totalorder %s292, %s293
    %p305 = scmp.eq.s32.totalorder %s28, 3
    %p306 = por %p304, %p305
    %p308 = scmp.ne.s32.totalorder %s293, %s307
    %p309 = scmp.eq.s32.totalorder %s28, 0
    %p310 = por %p308, %p309
    %s312 = sadd.s32 %s311, 1
    %p315 = scmp.eq.s32.totalorder %s22, 3
    %p316 = scmp.ne.s32.totalorder %s311, %s313
    %p317 = scmp.eq.s32.totalorder %s22, 0
    %p318 = por %p316, %p317
    %p319 = scmp.ne.s32.totalorder %s311, %s313
    %p320 = scmp.eq.s32.totalorder %s27, 3
    %p321 = por %p319, %p320
    %p322 = scmp.ne.s32.totalorder %s313, %s314
    %p323 = scmp.eq.s32.totalorder %s27, 0
    %p324 = por %p322, %p323
    %p325 = scmp.ne.s32.totalorder %s313, %s314
    %p326 = scmp.eq.s32.totalorder %s28, 3
    %p327 = por %p325, %p326
    %p329 = scmp.ne.s32.totalorder %s314, %s328
    %p330 = scmp.eq.s32.totalorder %s28, 0
    %p331 = por %p329, %p330
    %s333 = sadd.s32 %s332, 1
    %p336 = scmp.eq.s32.totalorder %s22, 3
    %p337 = scmp.ne.s32.totalorder %s332, %s334
    %p338 = scmp.eq.s32.totalorder %s22, 0
    %p339 = por %p337, %p338
    %p340 = scmp.ne.s32.totalorder %s332, %s334
    %p341 = scmp.eq.s32.totalorder %s27, 3
    %p342 = por %p340, %p341
    %p343 = scmp.ne.s32.totalorder %s334, %s335
    %p344 = scmp.eq.s32.totalorder %s27, 0
    %p345 = por %p343, %p344
    %p346 = scmp.ne.s32.totalorder %s334, %s335
    %p347 = scmp.eq.s32.totalorder %s28, 3
    %p348 = por %p346, %p347
    %p350 = scmp.ne.s32.totalorder %s335, %s349
    %p351 = scmp.eq.s32.totalorder %s28, 0
    %p352 = por %p350, %p351
    %s354 = sadd.s32 %s353, 1
    %p357 = scmp.eq.s32.totalorder %s22, 3
    %p358 = scmp.ne.s32.totalorder %s353, %s355
    %p359 = scmp.eq.s32.totalorder %s22, 0
    %p360 = por %p358, %p359
    %p361 = scmp.ne.s32.totalorder %s353, %s355
    %p362 = scmp.eq.s32.totalorder %s27, 3
    %p363 = por %p361, %p362
    %p364 = scmp.ne.s32.totalorder %s355, %s356
    %p365 = scmp.eq.s32.totalorder %s27, 0
    %p366 = por %p364, %p365
    %p367 = scmp.ne.s32.totalorder %s355, %s356
    %p368 = scmp.eq.s32.totalorder %s28, 3
    %p369 = por %p367, %p368
    %p371 = scmp.ne.s32.totalorder %s356, %s370
    %p372 = scmp.eq.s32.totalorder %s28, 0
    %p373 = por %p371, %p372
    %s375 = sadd.s32 %s374, 1
    %p378 = scmp.eq.s32.totalorder %s22, 3
    %p379 = scmp.ne.s32.totalorder %s374, %s376
    %p380 = scmp.eq.s32.totalorder %s22, 0
    %p381 = por %p379, %p380
    %p382 = scmp.ne.s32.totalorder %s374, %s376
    %p383 = scmp.eq.s32.totalorder %s27, 3
    %p384 = por %p382, %p383
    %p385 = scmp.ne.s32.totalorder %s376, %s377
    %p386 = scmp.eq.s32.totalorder %s27, 0
    %p387 = por %p385, %p386
    %p388 = scmp.ne.s32.totalorder %s376, %s377
    %p389 = scmp.eq.s32.totalorder %s28, 3
    %p390 = por %p388, %p389
    %p392 = scmp.ne.s32.totalorder %s377, %s391
    %p393 = scmp.eq.s32.totalorder %s28, 0
    %p394 = por %p392, %p393
    %s395 = ssub.s32 %s29, %s41
    %s396 = ssub.s32 %s30, %s37
    %s397 = sor.u32 %s395, %s396
    %p398 = scmp.eq.s32.totalorder %s397, 0
    %s400 = sadd.s32 %s399, 1
    %s401 = scalar_select %p398, %s399, %s400
    %p404 = pneg %p398
    %p405 = scmp.eq.s32.totalorder %s22, 3
    %p406 = por %p404, %p405
    %p407 = scmp.ne.s32.totalorder %s399, %s402
    %p408 = scmp.eq.s32.totalorder %s22, 0
    %p409 = por %p407, %p408
    %p410 = scmp.ne.s32.totalorder %s399, %s402
    %p411 = scmp.eq.s32.totalorder %s27, 3
    %p412 = por %p410, %p411
    %p413 = scmp.ne.s32.totalorder %s402, %s403
    %p414 = scmp.eq.s32.totalorder %s27, 0
    %p415 = por %p413, %p414
    %p416 = scmp.ne.s32.totalorder %s402, %s403
    %p417 = scmp.eq.s32.totalorder %s28, 3
    %p418 = por %p416, %p417
    %p420 = scmp.ne.s32.totalorder %s403, %s419
    %p421 = scmp.eq.s32.totalorder %s28, 0
    %p422 = por %p420, %p421
    %p423 = scmp.le.s32.totalorder 1, %s22
    %p424 = scmp.lt.s32.totalorder %s22, 5
    %p425 = pnand %p423, %p424
    %p426 = pneg %p425
    // Predicated region
    $region9: #{tpu_custom_call.1} parent=5 // pred_check
      _
    $region10: #{tpu_custom_call.1} parent=5 // pred_check_branch
      %428 = sbr.rel (%p425) target = $region12
    $region11: #{tpu_custom_call.1} parent=5 // pred_region
      %s429 = ssub.s32 %s22, 1
      // Predicated region
      $region13: #{tpu_custom_call.1} parent=11 // pred_check
        %p430 = pneg %p135
      $region14: #{tpu_custom_call.1} parent=11 // pred_check_branch
        %432 = sbr.rel (%p430) target = $region16
      $region15: #{tpu_custom_call.1} parent=11 // pred_region
        _
      $region16: #{tpu_custom_call.1} parent=11 // pred_fallthru
        _
      // Predicated region
      $region17: #{tpu_custom_call.1} parent=11 // pred_check
        %p433 = pneg %p156
      $region18: #{tpu_custom_call.1} parent=11 // pred_check_branch
        %435 = sbr.rel (%p433) target = $region20
      $region19: #{tpu_custom_call.1} parent=11 // pred_region
        _
      $region20: #{tpu_custom_call.1} parent=11 // pred_fallthru
        _
      // Predicated region
      $region21: #{tpu_custom_call.1} parent=11 // pred_check
        %p436 = pneg %p177
      $region22: #{tpu_custom_call.1} parent=11 // pred_check_branch
        %438 = sbr.rel (%p436) target = $region24
      $region23: #{tpu_custom_call.1} parent=11 // pred_region
        _
      $region24: #{tpu_custom_call.1} parent=11 // pred_fallthru
        _
      // Predicated region
      $region25: #{tpu_custom_call.1} parent=11 // pred_check
        %p439 = pneg %p198
      $region26: #{tpu_custom_call.1} parent=11 // pred_check_branch
        %441 = sbr.rel (%p439) target = $region28
      $region27: #{tpu_custom_call.1} parent=11 // pred_region
        _
      $region28: #{tpu_custom_call.1} parent=11 // pred_fallthru
        _
      // Predicated region
      $region29: #{tpu_custom_call.1} parent=11 // pred_check
        %p442 = pneg %p219
      $region30: #{tpu_custom_call.1} parent=11 // pred_check_branch
        %444 = sbr.rel (%p442) target = $region32
      $region31: #{tpu_custom_call.1} parent=11 // pred_region
        _
      $region32: #{tpu_custom_call.1} parent=11 // pred_fallthru
        _
      // Predicated region
      $region33: #{tpu_custom_call.1} parent=11 // pred_check
        %p445 = pneg %p240
      $region34: #{tpu_custom_call.1} parent=11 // pred_check_branch
        %447 = sbr.rel (%p445) target = $region36
      $region35: #{tpu_custom_call.1} parent=11 // pred_region
        _
      $region36: #{tpu_custom_call.1} parent=11 // pred_fallthru
        _
      // Predicated region
      $region37: #{tpu_custom_call.1} parent=11 // pred_check
        %p448 = pneg %p261
      $region38: #{tpu_custom_call.1} parent=11 // pred_check_branch
        %450 = sbr.rel (%p448) target = $region40
      $region39: #{tpu_custom_call.1} parent=11 // pred_region
        _
      $region40: #{tpu_custom_call.1} parent=11 // pred_fallthru
        _
      // Predicated region
      $region41: #{tpu_custom_call.1} parent=11 // pred_check
        %p451 = pneg %p282
      $region42: #{tpu_custom_call.1} parent=11 // pred_check_branch
        %453 = sbr.rel (%p451) target = $region44
      $region43: #{tpu_custom_call.1} parent=11 // pred_region
        _
      $region44: #{tpu_custom_call.1} parent=11 // pred_fallthru
        _
      // Predicated region
      $region45: #{tpu_custom_call.1} parent=11 // pred_check
        %p454 = pneg %p303
      $region46: #{tpu_custom_call.1} parent=11 // pred_check_branch
        %456 = sbr.rel (%p454) target = $region48
      $region47: #{tpu_custom_call.1} parent=11 // pred_region
        _
      $region48: #{tpu_custom_call.1} parent=11 // pred_fallthru
        _
      // Predicated region
      $region49: #{tpu_custom_call.1} parent=11 // pred_check
        %p457 = pneg %p324
      $region50: #{tpu_custom_call.1} parent=11 // pred_check_branch
        %459 = sbr.rel (%p457) target = $region52
      $region51: #{tpu_custom_call.1} parent=11 // pred_region
        _
      $region52: #{tpu_custom_call.1} parent=11 // pred_fallthru
        _
      // Predicated region
      $region53: #{tpu_custom_call.1} parent=11 // pred_check
        %p460 = pneg %p345
      $region54: #{tpu_custom_call.1} parent=11 // pred_check_branch
        %462 = sbr.rel (%p460) target = $region56
      $region55: #{tpu_custom_call.1} parent=11 // pred_region
        _
      $region56: #{tpu_custom_call.1} parent=11 // pred_fallthru
        _
      // Predicated region
      $region57: #{tpu_custom_call.1} parent=11 // pred_check
        %p463 = pneg %p366
      $region58: #{tpu_custom_call.1} parent=11 // pred_check_branch
        %465 = sbr.rel (%p463) target = $region60
      $region59: #{tpu_custom_call.1} parent=11 // pred_region
        _
      $region60: #{tpu_custom_call.1} parent=11 // pred_fallthru
        _
      // Predicated region
      $region61: #{tpu_custom_call.1} parent=11 // pred_check
        %p466 = pneg %p387
      $region62: #{tpu_custom_call.1} parent=11 // pred_check_branch
        %468 = sbr.rel (%p466) target = $region64
      $region63: #{tpu_custom_call.1} parent=11 // pred_region
        _
      $region64: #{tpu_custom_call.1} parent=11 // pred_fallthru
        _
    $region12: #{tpu_custom_call.1} parent=5 // pred_fallthru
      _
    %p469 = scmp.lt.s32.totalorder %s22, 4
    // Predicated region
    $region65: #{tpu_custom_call.1} parent=5 // pred_check
      %p470 = pneg %p469
    $region66: #{tpu_custom_call.1} parent=5 // pred_check_branch
      %472 = sbr.rel (%p470) target = $region68
    $region67: #{tpu_custom_call.1} parent=5 // pred_region
      // Predicated region
      $region69: #{tpu_custom_call.1} parent=67 // pred_check
        %p473 = pneg %p56
      $region70: #{tpu_custom_call.1} parent=67 // pred_check_branch
        %475 = sbr.rel (%p473) target = $region72
      $region71: #{tpu_custom_call.1} parent=67 // pred_region
        %s476 = smul.u32 4, %s30
        %p477 = scmp.lt.s32.totalorder %s29, 1
        %s478 = scalar_select %p477, %s29, 1
        %p479 = scmp.lt.s32.totalorder %s476, 7
        %s480 = scalar_select %p479, %s476, 7
        %s481 = smul.addr %s478, 8
        %s482 = sadd.s32 %s480, %s481
        %s483 = smul.addr %s482, 8
        %s484 = scalar_lea.vmem %s0, %s483
        %s485 = smul.u32 4, %s30
      $region72: #{tpu_custom_call.1} parent=67 // pred_fallthru
        _
      // Predicated region
      $region73: #{tpu_custom_call.1} parent=67 // pred_check
        %p486 = pneg %p82
      $region74: #{tpu_custom_call.1} parent=67 // pred_check_branch
        %488 = sbr.rel (%p486) target = $region76
      $region75: #{tpu_custom_call.1} parent=67 // pred_region
        %p489 = scmp.lt.s32.totalorder %s29, 1
        %s490 = scalar_select %p489, %s29, 1
        %s491 = scalar_lea.vmem %s1, %s490
      $region76: #{tpu_custom_call.1} parent=67 // pred_fallthru
        _
      // Predicated region
      $region77: #{tpu_custom_call.1} parent=67 // pred_check
        %p492 = pneg %p108
      $region78: #{tpu_custom_call.1} parent=67 // pred_check_branch
        %494 = sbr.rel (%p492) target = $region80
      $region79: #{tpu_custom_call.1} parent=67 // pred_region
        %p495 = scmp.lt.s32.totalorder %s29, 1
        %s496 = scalar_select %p495, %s29, 1
        %s497 = scalar_lea.vmem %s2, %s496
      $region80: #{tpu_custom_call.1} parent=67 // pred_fallthru
        _
    $region68: #{tpu_custom_call.1} parent=5 // pred_fallthru
      _
    %p498 = scmp.le.s32.totalorder 1, %s22
    %p499 = scmp.lt.s32.totalorder %s22, 5
    %p500 = pnand %p498, %p499
    %p501 = pneg %p500
    // Predicated region
    $region81: #{tpu_custom_call.1} parent=5 // pred_check
      _
    $region82: #{tpu_custom_call.1} parent=5 // pred_check_branch
      %503 = sbr.rel (%p500) target = $region84
    $region83: #{tpu_custom_call.1} parent=5 // pred_region
      %s504 = ssub.s32 %s22, 1
      %s505 = smul.u32 4, %s32
      %p506 = scmp.lt.s32.totalorder %s31, 1
      %s507 = scalar_select %p506, %s31, 1
      %p508 = scmp.lt.s32.totalorder %s505, 7
      %s509 = scalar_select %p508, %s505, 7
      %s510 = smul.addr %s507, 8
      %s511 = sadd.s32 %s509, %s510
      %s512 = smul.addr %s511, 8
      %s513 = scalar_lea.vmem %s0, %s512
      %p514 = pneg %p62
      %p515 = pneg %p59
      %p516 = scmp.lt.s32.totalorder %s31, 1
      %s517 = scalar_select %p516, %s31, 1
      %s518 = scalar_lea.vmem %s1, %s517
      %p519 = pneg %p88
      %p520 = pneg %p85
      %p521 = scmp.lt.s32.totalorder %s31, 1
      %s522 = scalar_select %p521, %s31, 1
      %s523 = scalar_lea.vmem %s2, %s522
      %p524 = pneg %p114
      %p525 = pneg %p111
      %p526 = pneg %p135
      %p527 = pneg %p132
      %p528 = pneg %p156
      %p529 = pneg %p153
      %p530 = pneg %p177
      %p531 = pneg %p174
      %p532 = pneg %p198
      %p533 = pneg %p195
      %p534 = pneg %p219
      %p535 = pneg %p216
      %p536 = pneg %p240
      %p537 = pneg %p237
      %p538 = pneg %p261
      %p539 = pneg %p258
      %p540 = pneg %p282
      %p541 = pneg %p279
      %p542 = pneg %p303
      %p543 = pneg %p300
      %p544 = pneg %p324
      %p545 = pneg %p321
      %p546 = pneg %p345
      %p547 = pneg %p342
      %p548 = pneg %p366
      %p549 = pneg %p363
      %p550 = pneg %p387
      %p551 = pneg %p384
      %p552 = pneg %p415
      %p553 = pneg %p412
      %s554 = smul.u32 4, %s32
      %p555 = scmp.lt.s32.totalorder %s31, 1
      %s556 = scalar_select %p555, %s31, 1
      %p557 = scmp.lt.s32.totalorder %s554, 7
      %s558 = scalar_select %p557, %s554, 7
      %s559 = smul.addr %s556, 8
      %s560 = sadd.s32 %s558, %s559
      %s561 = smul.addr %s560, 8
      %s562 = scalar_lea.vmem %s16, %s561
      %s563 = smul.u32 4, %s32
      %p564 = scmp.lt.s32.totalorder %s31, 1
      %s565 = scalar_select %p564, %s31, 1
      %p566 = scmp.lt.s32.totalorder %s563, 7
      %s567 = scalar_select %p566, %s563, 7
      %s568 = smul.addr %s565, 8
      %s569 = sadd.s32 %s567, %s568
      %s570 = smul.addr %s569, 8
      %s571 = scalar_lea.vmem %s0, %s570
      %s572 = smul.u32 4, %s32
      %p573 = scmp.lt.s32.totalorder %s31, 1
      %s574 = scalar_select %p573, %s31, 1
      %s575 = scalar_lea.vmem %s1, %s574
      %p576 = scmp.lt.s32.totalorder %s31, 1
      %s577 = scalar_select %p576, %s31, 1
      %s578 = scalar_lea.vmem %s2, %s577
      %s579 = smul.u32 4, %s32
      %p580 = scmp.lt.s32.totalorder %s31, 1
      %s581 = scalar_select %p580, %s31, 1
      %p582 = scmp.lt.s32.totalorder %s579, 7
      %s583 = scalar_select %p582, %s579, 7
      %s584 = smul.addr %s581, 8
      %s585 = sadd.s32 %s583, %s584
      %s586 = smul.addr %s585, 8
      %s587 = scalar_lea.vmem %s16, %s586
      %s588 = smul.u32 4, %s32
      %v590 = vld [vmem:[%s571] sm:$0xff]
      %v591 = vld [vmem:[%s571 + $0x8] sm:$0xff]
      %v592 = vld [vmem:[%s571 + $0x10] sm:$0xff]
      %v593 = vld [vmem:[%s571 + $0x18] sm:$0xff]
      %v594 = vld [vmem:[%s575] sm:$0x1]
      %v596 = vlaneseq
      %v597 = vshrl.u32 %v596, 7
      %v598 = vsub.s32 0, %v597
      %v599 = vrot.slane %v594, %v598
      %v601 = vmul.f32 %v590, %v599
      %v602 = vmul.f32 %v591, %v599
      %v603 = vmul.f32 %v592, %v599
      %v604 = vmul.f32 %v593, %v599
      %v605 = vpack.c.bf16 %v602, %v601
      %v606 = vpack.c.bf16 %v604, %v603
      %v607 = vld [vmem:[%s3] sm:$0xf]
      %v608 = vld [vmem:[%s3 + $0x4] sm:$0xf]
      %v609 = vld [vmem:[%s3 + $0x8] sm:$0xf]
      %v610 = vld [vmem:[%s3 + $0xc] sm:$0xf]
      %v611 = vld [vmem:[%s578] sm:$0x1]
      %v613 = vlaneseq
      %v614 = vshrl.u32 %v613, 7
      %v615 = vsub.s32 0, %v614
      %v616 = vrot.slane %v611, %v615
      %v622 = vunpack.c.l.b16 %v607
      %v623 = vunpack.c.l.b16 %v608
      %v624 = vunpack.c.l.b16 %v609
      %v625 = vunpack.c.l.b16 %v610
      %v626 = vpack.c.b16 %v623, %v622
      %v627 = vpack.c.b16 %v625, %v624
      %vm630 = vcmask 261120
      %v632 = vsel %vm630, %v605, 0
      %v635 = vsel %vm630, %v606, 0
      %637 = vmatprep.subr.bf16.mxu0 0
      %638 = vmatpush1.bf16.msra.mxu0 0
      %639 = vmatprep.subr.bf16.mxu0 0
      %640 = vmatpush1.bf16.msra.mxu0 0
      %641 = vmatprep.subr.bf16.mxu0 0
      %642 = vmatpush1.bf16.msra.mxu0 0
      %643 = vmatprep.subr.bf16.mxu0 0
      %644 = vmatpush1.bf16.msra.mxu0 0
      %645 = vmatprep.subr.bf16.mxu0 0
      %646 = vmatpush1.bf16.msra.mxu0 0
      %647 = vmatprep.subr.bf16.mxu0 0
      %648 = vmatpush1.bf16.msra.mxu0 0
      %649 = vmatprep.subr.bf16.mxu0 0
      %650 = vmatpush1.bf16.msra.mxu0 %v627
      %651 = vmatprep.subr.bf16.mxu0 0
      %652 = vmatpush1.bf16.msra.mxu0 %v626
      %653 = vmatprep.subr.bf16.mxu0 0
      %654 = vmatpush2.bf16.msra.mxu0 0
      %655 = vmatprep.subr.bf16.mxu0 0
      %656 = vmatpush2.bf16.msra.mxu0 0
      %657 = vmatprep.subr.bf16.mxu0 0
      %658 = vmatpush2.bf16.msra.mxu0 0
      %659 = vmatprep.subr.bf16.mxu0 0
      %660 = vmatpush2.bf16.msra.mxu0 0
      %661 = vmatprep.subr.bf16.mxu0 0
      %662 = vmatpush2.bf16.msra.mxu0 0
      %663 = vmatprep.subr.bf16.mxu0 0
      %664 = vmatpush2.bf16.msra.mxu0 0
      %665 = vmatprep.subr.bf16.mxu0 0
      %666 = vmatpush2.bf16.msra.mxu0 0
      %667 = vmatprep.subr.bf16.mxu0 0
      %668 = vmatpush2.bf16.msra.mxu0 0
      %669 = vmatprep.mubr.bf16.mxu0 0
      %670 = vmatmul.mubr.bf16.gmra.mxu0 %v632
      %v671 = vpop.f32.mrf.mxu0
      %v672 = vadd.f32 %v616, %v671
      %v673 = vpop.f32.mrf.mxu0
      %v674 = vpop.f32.mrf.mxu0
      %v675 = vadd.f32 %v616, %v674
      %v676 = vpop.f32.mrf.mxu0
      %677 = vmatprep.mubr.bf16.mxu0 0
      %678 = vmatmul.mubr.bf16.gmra.mxu0 %v635
      %v679 = vpop.f32.mrf.mxu0
      %v680 = vadd.f32 %v616, %v679
      %v681 = vpop.f32.mrf.mxu0
      %v682 = vpop.f32.mrf.mxu0
      %v683 = vadd.f32 %v616, %v682
      %v684 = vpop.f32.mrf.mxu0
      %685 = vdwg.mxu0
      %v686 = vld [vmem:[%s4] sm:$0x1]
      %v687 = vld [vmem:[%s5] sm:$0x1]
      %v688 = vsel %vm630, %v672, 0.0
      %689 = vadd.xlane.f32.xlu0 %v688
      %v690 = vpop.xlane.xlu0 %689
      %v691 = vsel %vm630, %v675, 0.0
      %692 = vadd.xlane.f32.xlu0 %v691
      %v693 = vpop.xlane.xlu0 %692
      %v694 = vsel %vm630, %v680, 0.0
      %695 = vadd.xlane.f32.xlu0 %v694
      %v696 = vpop.xlane.xlu0 %695
      %v697 = vsel %vm630, %v683, 0.0
      %698 = vadd.xlane.f32.xlu0 %v697
      %v699 = vpop.xlane.xlu0 %698
      %v700 = vrcp.pop 32.0
      %v701 = vmul.f32 %v690, %v700
      %v702 = vmul.f32 %v693, %v700
      %v703 = vmul.f32 %v696, %v700
      %v704 = vmul.f32 %v699, %v700
      %v705 = vmul.f32 %v672, %v672
      %v706 = vmul.f32 %v675, %v675
      %v707 = vmul.f32 %v680, %v680
      %v708 = vmul.f32 %v683, %v683
      %v709 = vsel %vm630, %v705, 0.0
      %710 = vadd.xlane.f32.xlu0 %v709
      %v711 = vpop.xlane.xlu0 %710
      %v712 = vsel %vm630, %v706, 0.0
      %713 = vadd.xlane.f32.xlu0 %v712
      %v714 = vpop.xlane.xlu0 %713
      %v715 = vsel %vm630, %v707, 0.0
      %716 = vadd.xlane.f32.xlu0 %v715
      %v717 = vpop.xlane.xlu0 %716
      %v718 = vsel %vm630, %v708, 0.0
      %719 = vadd.xlane.f32.xlu0 %v718
      %v720 = vpop.xlane.xlu0 %719
      %v721 = vmul.f32 %v711, %v700
      %v722 = vmul.f32 %v714, %v700
      %v723 = vmul.f32 %v717, %v700
      %v724 = vmul.f32 %v720, %v700
      %v725 = vmul.f32 %v701, %v701
      %v726 = vmul.f32 %v702, %v702
      %v727 = vmul.f32 %v703, %v703
      %v728 = vmul.f32 %v704, %v704
      %v729 = vsub.f32 %v721, %v725
      %v730 = vsub.f32 %v722, %v726
      %v731 = vsub.f32 %v723, %v727
      %v732 = vsub.f32 %v724, %v728
      %v733 = vmax.f32 %v729, 0.0
      %v734 = vmax.f32 %v730, 0.0
      %v735 = vmax.f32 %v731, 0.0
      %v736 = vmax.f32 %v732, 0.0
      %v737 = vadd.f32 %v733, 1e-05
      %v738 = vadd.f32 %v734, 1e-05
      %v739 = vadd.f32 %v735, 1e-05
      %v740 = vadd.f32 %v736, 1e-05
      %v741 = vrsqrt.pop %v737
      %v742 = vrsqrt.pop %v738
      %v743 = vrsqrt.pop %v739
      %v744 = vrsqrt.pop %v740
      %v745 = vsub.f32 %v672, %v701
      %v746 = vsub.f32 %v675, %v702
      %v747 = vsub.f32 %v680, %v703
      %v748 = vsub.f32 %v683, %v704
      %v749 = vmul.f32 %v745, %v741
      %v750 = vmul.f32 %v746, %v742
      %v751 = vmul.f32 %v747, %v743
      %v752 = vmul.f32 %v748, %v744
      %v754 = vlaneseq
      %v755 = vshrl.u32 %v754, 7
      %v756 = vsub.s32 0, %v755
      %v757 = vrot.slane %v686, %v756
      %v759 = vmul.f32 %v749, %v757
      %v760 = vmul.f32 %v750, %v757
      %v761 = vmul.f32 %v751, %v757
      %v762 = vmul.f32 %v752, %v757
      %v764 = vlaneseq
      %v765 = vshrl.u32 %v764, 7
      %v766 = vsub.s32 0, %v765
      %v767 = vrot.slane %v687, %v766
      %v769 = vadd.f32 %v759, %v767
      %v770 = vadd.f32 %v760, %v767
      %v771 = vadd.f32 %v761, %v767
      %v772 = vadd.f32 %v762, %v767
      %v773 = vadd.f32 %v769, %v672
      %v774 = vadd.f32 %v770, %v675
      %v775 = vadd.f32 %v771, %v680
      %v776 = vadd.f32 %v772, %v683
      %v777 = vld [vmem:[%s6] sm:$0x1]
      %v778 = vld [vmem:[%s7] sm:$0x1]
      %v779 = vsel %vm630, %v773, 0.0
      %780 = vadd.xlane.f32.xlu0 %v779
      %v781 = vpop.xlane.xlu0 %780
      %v782 = vsel %vm630, %v774, 0.0
      %783 = vadd.xlane.f32.xlu0 %v782
      %v784 = vpop.xlane.xlu0 %783
      %v785 = vsel %vm630, %v775, 0.0
      %786 = vadd.xlane.f32.xlu0 %v785
      %v787 = vpop.xlane.xlu0 %786
      %v788 = vsel %vm630, %v776, 0.0
      %789 = vadd.xlane.f32.xlu0 %v788
      %v790 = vpop.xlane.xlu0 %789
      %v791 = vmul.f32 %v781, %v700
      %v792 = vmul.f32 %v784, %v700
      %v793 = vmul.f32 %v787, %v700
      %v794 = vmul.f32 %v790, %v700
      %v795 = vmul.f32 %v773, %v773
      %v796 = vmul.f32 %v774, %v774
      %v797 = vmul.f32 %v775, %v775
      %v798 = vmul.f32 %v776, %v776
      %v799 = vsel %vm630, %v795, 0.0
      %800 = vadd.xlane.f32.xlu0 %v799
      %v801 = vpop.xlane.xlu0 %800
      %v802 = vsel %vm630, %v796, 0.0
      %803 = vadd.xlane.f32.xlu0 %v802
      %v804 = vpop.xlane.xlu0 %803
      %v805 = vsel %vm630, %v797, 0.0
      %806 = vadd.xlane.f32.xlu0 %v805
      %v807 = vpop.xlane.xlu0 %806
      %v808 = vsel %vm630, %v798, 0.0
      %809 = vadd.xlane.f32.xlu0 %v808
      %v810 = vpop.xlane.xlu0 %809
      %v811 = vmul.f32 %v801, %v700
      %v812 = vmul.f32 %v804, %v700
      %v813 = vmul.f32 %v807, %v700
      %v814 = vmul.f32 %v810, %v700
      %v815 = vmul.f32 %v791, %v791
      %v816 = vmul.f32 %v792, %v792
      %v817 = vmul.f32 %v793, %v793
      %v818 = vmul.f32 %v794, %v794
      %v819 = vsub.f32 %v811, %v815
      %v820 = vsub.f32 %v812, %v816
      %v821 = vsub.f32 %v813, %v817
      %v822 = vsub.f32 %v814, %v818
      %v823 = vmax.f32 %v819, 0.0
      %v824 = vmax.f32 %v820, 0.0
      %v825 = vmax.f32 %v821, 0.0
      %v826 = vmax.f32 %v822, 0.0
      %v827 = vadd.f32 %v823, 1e-05
      %v828 = vadd.f32 %v824, 1e-05
      %v829 = vadd.f32 %v825, 1e-05
      %v830 = vadd.f32 %v826, 1e-05
      %v831 = vrsqrt.pop %v827
      %v832 = vrsqrt.pop %v828
      %v833 = vrsqrt.pop %v829
      %v834 = vrsqrt.pop %v830
      %v835 = vsub.f32 %v773, %v791
      %v836 = vsub.f32 %v774, %v792
      %v837 = vsub.f32 %v775, %v793
      %v838 = vsub.f32 %v776, %v794
      %v839 = vmul.f32 %v835, %v831
      %v840 = vmul.f32 %v836, %v832
      %v841 = vmul.f32 %v837, %v833
      %v842 = vmul.f32 %v838, %v834
      %v844 = vlaneseq
      %v845 = vshrl.u32 %v844, 7
      %v846 = vsub.s32 0, %v845
      %v847 = vrot.slane %v777, %v846
      %v849 = vmul.f32 %v839, %v847
      %v850 = vmul.f32 %v840, %v847
      %v851 = vmul.f32 %v841, %v847
      %v852 = vmul.f32 %v842, %v847
      %v854 = vlaneseq
      %v855 = vshrl.u32 %v854, 7
      %v856 = vsub.s32 0, %v855
      %v857 = vrot.slane %v778, %v856
      %v859 = vadd.f32 %v849, %v857
      %v860 = vadd.f32 %v850, %v857
      %v861 = vadd.f32 %v851, %v857
      %v862 = vadd.f32 %v852, %v857
      %v863 = vadd.f32 %v859, %v773
      %v864 = vadd.f32 %v860, %v774
      %v865 = vadd.f32 %v861, %v775
      %v866 = vadd.f32 %v862, %v776
      %v867 = vsel %vm630, %v863, 0.0
      %868 = vadd.xlane.f32.xlu0 %v867
      %v869 = vpop.xlane.xlu0 %868
      %v870 = vsel %vm630, %v864, 0.0
      %871 = vadd.xlane.f32.xlu0 %v870
      %v872 = vpop.xlane.xlu0 %871
      %v873 = vsel %vm630, %v865, 0.0
      %874 = vadd.xlane.f32.xlu0 %v873
      %v875 = vpop.xlane.xlu0 %874
      %v876 = vsel %vm630, %v866, 0.0
      %877 = vadd.xlane.f32.xlu0 %v876
      %v878 = vpop.xlane.xlu0 %877
      %v879 = vmul.f32 %v869, %v700
      %v880 = vmul.f32 %v872, %v700
      %v881 = vmul.f32 %v875, %v700
      %v882 = vmul.f32 %v878, %v700
      %v883 = vmul.f32 %v863, %v863
      %v884 = vmul.f32 %v864, %v864
      %v885 = vmul.f32 %v865, %v865
      %v886 = vmul.f32 %v866, %v866
      %v887 = vsel %vm630, %v883, 0.0
      %888 = vadd.xlane.f32.xlu0 %v887
      %v889 = vpop.xlane.xlu0 %888
      %v890 = vsel %vm630, %v884, 0.0
      %891 = vadd.xlane.f32.xlu0 %v890
      %v892 = vpop.xlane.xlu0 %891
      %v893 = vsel %vm630, %v885, 0.0
      %894 = vadd.xlane.f32.xlu0 %v893
      %v895 = vpop.xlane.xlu0 %894
      %v896 = vsel %vm630, %v886, 0.0
      %897 = vadd.xlane.f32.xlu0 %v896
      %v898 = vpop.xlane.xlu0 %897
      %v899 = vmul.f32 %v889, %v700
      %v900 = vmul.f32 %v892, %v700
      %v901 = vmul.f32 %v895, %v700
      %v902 = vmul.f32 %v898, %v700
      %v903 = vmul.f32 %v879, %v879
      %v904 = vmul.f32 %v880, %v880
      %v905 = vmul.f32 %v881, %v881
      %v906 = vmul.f32 %v882, %v882
      %v907 = vsub.f32 %v899, %v903
      %v908 = vsub.f32 %v900, %v904
      %v909 = vsub.f32 %v901, %v905
      %v910 = vsub.f32 %v902, %v906
      %v911 = vmax.f32 %v907, 0.0
      %v912 = vmax.f32 %v908, 0.0
      %v913 = vmax.f32 %v909, 0.0
      %v914 = vmax.f32 %v910, 0.0
      %v915 = vadd.f32 %v911, 1e-05
      %v916 = vadd.f32 %v912, 1e-05
      %v917 = vadd.f32 %v913, 1e-05
      %v918 = vadd.f32 %v914, 1e-05
      %v919 = vrsqrt.pop %v915
      %v920 = vrsqrt.pop %v916
      %v921 = vrsqrt.pop %v917
      %v922 = vrsqrt.pop %v918
      %v923 = vsub.f32 %v863, %v879
      %v924 = vsub.f32 %v864, %v880
      %v925 = vsub.f32 %v865, %v881
      %v926 = vsub.f32 %v866, %v882
      %v927 = vmul.f32 %v923, %v919
      %v928 = vmul.f32 %v924, %v920
      %v929 = vmul.f32 %v925, %v921
      %v930 = vmul.f32 %v926, %v922
      %v931 = vpack.c.bf16 %v928, %v927
      %v932 = vpack.c.bf16 %v930, %v929
      %v933 = vld [vmem:[%s8] sm:$0xf]
      %v934 = vld [vmem:[%s8 + $0x4] sm:$0xf]
      %v935 = vld [vmem:[%s8 + $0x8] sm:$0xf]
      %v936 = vld [vmem:[%s8 + $0xc] sm:$0xf]
      %v937 = vld [vmem:[%s9] sm:$0x1]
      %v939 = vlaneseq
      %v940 = vshrl.u32 %v939, 7
      %v941 = vsub.s32 0, %v940
      %v942 = vrot.slane %v937, %v941
      %v948 = vunpack.c.l.b16 %v933
      %v949 = vunpack.c.l.b16 %v934
      %v950 = vunpack.c.l.b16 %v935
      %v951 = vunpack.c.l.b16 %v936
      %v952 = vpack.c.b16 %v949, %v948
      %v953 = vpack.c.b16 %v951, %v950
      %v957 = vsel %vm630, %v931, 0
      %v960 = vsel %vm630, %v932, 0
      %962 = vmatprep.subr.bf16.mxu0 0
      %963 = vmatpush1.bf16.msra.mxu0 0
      %964 = vmatprep.subr.bf16.mxu0 0
      %965 = vmatpush1.bf16.msra.mxu0 0
      %966 = vmatprep.subr.bf16.mxu0 0
      %967 = vmatpush1.bf16.msra.mxu0 0
      %968 = vmatprep.subr.bf16.mxu0 0
      %969 = vmatpush1.bf16.msra.mxu0 0
      %970 = vmatprep.subr.bf16.mxu0 0
      %971 = vmatpush1.bf16.msra.mxu0 0
      %972 = vmatprep.subr.bf16.mxu0 0
      %973 = vmatpush1.bf16.msra.mxu0 0
      %974 = vmatprep.subr.bf16.mxu0 0
      %975 = vmatpush1.bf16.msra.mxu0 %v953
      %976 = vmatprep.subr.bf16.mxu0 0
      %977 = vmatpush1.bf16.msra.mxu0 %v952
      %978 = vmatprep.subr.bf16.mxu0 0
      %979 = vmatpush2.bf16.msra.mxu0 0
      %980 = vmatprep.subr.bf16.mxu0 0
      %981 = vmatpush2.bf16.msra.mxu0 0
      %982 = vmatprep.subr.bf16.mxu0 0
      %983 = vmatpush2.bf16.msra.mxu0 0
      %984 = vmatprep.subr.bf16.mxu0 0
      %985 = vmatpush2.bf16.msra.mxu0 0
      %986 = vmatprep.subr.bf16.mxu0 0
      %987 = vmatpush2.bf16.msra.mxu0 0
      %988 = vmatprep.subr.bf16.mxu0 0
      %989 = vmatpush2.bf16.msra.mxu0 0
      %990 = vmatprep.subr.bf16.mxu0 0
      %991 = vmatpush2.bf16.msra.mxu0 0
      %992 = vmatprep.subr.bf16.mxu0 0
      %993 = vmatpush2.bf16.msra.mxu0 0
      %994 = vmatprep.mubr.bf16.mxu0 0
      %995 = vmatmul.mubr.bf16.gmra.mxu0 %v957
      %v996 = vpop.f32.mrf.mxu0
      %v997 = vadd.f32 %v942, %v996
      %v998 = vpop.f32.mrf.mxu0
      %v999 = vpop.f32.mrf.mxu0
      %v1000 = vadd.f32 %v942, %v999
      %v1001 = vpop.f32.mrf.mxu0
      %1002 = vmatprep.mubr.bf16.mxu0 0
      %1003 = vmatmul.mubr.bf16.gmra.mxu0 %v960
      %v1004 = vpop.f32.mrf.mxu0
      %v1005 = vadd.f32 %v942, %v1004
      %v1006 = vpop.f32.mrf.mxu0
      %v1007 = vpop.f32.mrf.mxu0
      %v1008 = vadd.f32 %v942, %v1007
      %v1009 = vpop.f32.mrf.mxu0
      %1010 = vdwg.mxu0
      %v1011 = vld [vmem:[%s10] sm:$0xf]
      %v1012 = vld [vmem:[%s10 + $0x4] sm:$0xf]
      %v1013 = vld [vmem:[%s10 + $0x8] sm:$0xf]
      %v1014 = vld [vmem:[%s10 + $0xc] sm:$0xf]
      %v1015 = vld [vmem:[%s11] sm:$0x1]
      %v1017 = vlaneseq
      %v1018 = vshrl.u32 %v1017, 7
      %v1019 = vsub.s32 0, %v1018
      %v1020 = vrot.slane %v1015, %v1019
      %v1026 = vunpack.c.l.b16 %v1011
      %v1027 = vunpack.c.l.b16 %v1012
      %v1028 = vunpack.c.l.b16 %v1013
      %v1029 = vunpack.c.l.b16 %v1014
      %v1030 = vpack.c.b16 %v1027, %v1026
      %v1031 = vpack.c.b16 %v1029, %v1028
      %1034 = vmatprep.subr.bf16.mxu0 0
      %1035 = vmatpush1.bf16.msra.mxu0 0
      %1036 = vmatprep.subr.bf16.mxu0 0
      %1037 = vmatpush1.bf16.msra.mxu0 0
      %1038 = vmatprep.subr.bf16.mxu0 0
      %1039 = vmatpush1.bf16.msra.mxu0 0
      %1040 = vmatprep.subr.bf16.mxu0 0
      %1041 = vmatpush1.bf16.msra.mxu0 0
      %1042 = vmatprep.subr.bf16.mxu0 0
      %1043 = vmatpush1.bf16.msra.mxu0 0
      %1044 = vmatprep.subr.bf16.mxu0 0
      %1045 = vmatpush1.bf16.msra.mxu0 0
      %1046 = vmatprep.subr.bf16.mxu0 0
      %1047 = vmatpush1.bf16.msra.mxu0 %v1031
      %1048 = vmatprep.subr.bf16.mxu0 0
      %1049 = vmatpush1.bf16.msra.mxu0 %v1030
      %1050 = vmatprep.subr.bf16.mxu0 0
      %1051 = vmatpush2.bf16.msra.mxu0 0
      %1052 = vmatprep.subr.bf16.mxu0 0
      %1053 = vmatpush2.bf16.msra.mxu0 0
      %1054 = vmatprep.subr.bf16.mxu0 0
      %1055 = vmatpush2.bf16.msra.mxu0 0
      %1056 = vmatprep.subr.bf16.mxu0 0
      %1057 = vmatpush2.bf16.msra.mxu0 0
      %1058 = vmatprep.subr.bf16.mxu0 0
      %1059 = vmatpush2.bf16.msra.mxu0 0
      %1060 = vmatprep.subr.bf16.mxu0 0
      %1061 = vmatpush2.bf16.msra.mxu0 0
      %1062 = vmatprep.subr.bf16.mxu0 0
      %1063 = vmatpush2.bf16.msra.mxu0 0
      %1064 = vmatprep.subr.bf16.mxu0 0
      %1065 = vmatpush2.bf16.msra.mxu0 0
      %1066 = vmatprep.mubr.bf16.mxu0 0
      %1067 = vmatmul.mubr.bf16.gmra.mxu0 %v957
      %v1068 = vpop.f32.mrf.mxu0
      %v1069 = vadd.f32 %v1020, %v1068
      %v1070 = vpop.f32.mrf.mxu0
      %v1071 = vpop.f32.mrf.mxu0
      %v1072 = vadd.f32 %v1020, %v1071
      %v1073 = vpop.f32.mrf.mxu0
      %1074 = vmatprep.mubr.bf16.mxu0 0
      %1075 = vmatmul.mubr.bf16.gmra.mxu0 %v960
      %v1076 = vpop.f32.mrf.mxu0
      %v1077 = vadd.f32 %v1020, %v1076
      %v1078 = vpop.f32.mrf.mxu0
      %v1079 = vpop.f32.mrf.mxu0
      %v1080 = vadd.f32 %v1020, %v1079
      %v1081 = vpop.f32.mrf.mxu0
      %1082 = vdwg.mxu0
      %v1083 = vmul.f32 %v1069, 0.5
      %v1084 = vmul.f32 %v1072, 0.5
      %v1085 = vmul.f32 %v1077, 0.5
      %v1086 = vmul.f32 %v1080, 0.5
      %v1087 = vmul.f32 %v1069, 0.70710677
      %v1088 = vmul.f32 %v1072, 0.70710677
      %v1089 = vmul.f32 %v1077, 0.70710677
      %v1090 = vmul.f32 %v1080, 0.70710677
      %v1091 = vand.u32 2147483647, %v1087
      %v1092 = vand.u32 2147483647, %v1088
      %v1093 = vand.u32 2147483647, %v1089
      %v1094 = vand.u32 2147483647, %v1090
      %v1095 = vmul.f32 %v1091, 0.5
      %v1096 = vmul.f32 %v1092, 0.5
      %v1097 = vmul.f32 %v1093, 0.5
      %v1098 = vmul.f32 %v1094, 0.5
      %v1099 = vadd.f32 %v1095, 1.0
      %v1100 = vadd.f32 %v1096, 1.0
      %v1101 = vadd.f32 %v1097, 1.0
      %v1102 = vadd.f32 %v1098, 1.0
      %v1103 = vrcp.pop %v1099
      %v1104 = vrcp.pop %v1100
      %v1105 = vrcp.pop %v1101
      %v1106 = vrcp.pop %v1102
      %v1107 = vmul.f32 %v1103, 0.17087276
      %v1108 = vmul.f32 %v1104, 0.17087276
      %v1109 = vmul.f32 %v1105, 0.17087276
      %v1110 = vmul.f32 %v1106, 0.17087276
      %v1111 = vadd.f32 %v1107, -0.82215226
      %v1112 = vadd.f32 %v1108, -0.82215226
      %v1113 = vadd.f32 %v1109, -0.82215226
      %v1114 = vadd.f32 %v1110, -0.82215226
      %v1115 = vmul.f32 %v1103, %v1111
      %v1116 = vmul.f32 %v1104, %v1112
      %v1117 = vmul.f32 %v1105, %v1113
      %v1118 = vmul.f32 %v1106, %v1114
      %v1119 = vadd.f32 %v1115, 1.4885159
      %v1120 = vadd.f32 %v1116, 1.4885159
      %v1121 = vadd.f32 %v1117, 1.4885159
      %v1122 = vadd.f32 %v1118, 1.4885159
      %v1123 = vmul.f32 %v1103, %v1119
      %v1124 = vmul.f32 %v1104, %v1120
      %v1125 = vmul.f32 %v1105, %v1121
      %v1126 = vmul.f32 %v1106, %v1122
      %v1127 = vadd.f32 %v1123, -1.135204
      %v1128 = vadd.f32 %v1124, -1.135204
      %v1129 = vadd.f32 %v1125, -1.135204
      %v1130 = vadd.f32 %v1126, -1.135204
      %v1131 = vmul.f32 %v1103, %v1127
      %v1132 = vmul.f32 %v1104, %v1128
      %v1133 = vmul.f32 %v1105, %v1129
      %v1134 = vmul.f32 %v1106, %v1130
      %v1135 = vadd.f32 %v1131, 0.27886808
      %v1136 = vadd.f32 %v1132, 0.27886808
      %v1137 = vadd.f32 %v1133, 0.27886808
      %v1138 = vadd.f32 %v1134, 0.27886808
      %v1139 = vmul.f32 %v1103, %v1135
      %v1140 = vmul.f32 %v1104, %v1136
      %v1141 = vmul.f32 %v1105, %v1137
      %v1142 = vmul.f32 %v1106, %v1138
      %v1143 = vadd.f32 %v1139, -0.18628806
      %v1144 = vadd.f32 %v1140, -0.18628806
      %v1145 = vadd.f32 %v1141, -0.18628806
      %v1146 = vadd.f32 %v1142, -0.18628806
      %v1147 = vmul.f32 %v1103, %v1143
      %v1148 = vmul.f32 %v1104, %v1144
      %v1149 = vmul.f32 %v1105, %v1145
      %v1150 = vmul.f32 %v1106, %v1146
      %v1151 = vadd.f32 %v1147, 0.09678418
      %v1152 = vadd.f32 %v1148, 0.09678418
      %v1153 = vadd.f32 %v1149, 0.09678418
      %v1154 = vadd.f32 %v1150, 0.09678418
      %v1155 = vmul.f32 %v1103, %v1151
      %v1156 = vmul.f32 %v1104, %v1152
      %v1157 = vmul.f32 %v1105, %v1153
      %v1158 = vmul.f32 %v1106, %v1154
      %v1159 = vadd.f32 %v1155, 0.37409195
      %v1160 = vadd.f32 %v1156, 0.37409195
      %v1161 = vadd.f32 %v1157, 0.37409195
      %v1162 = vadd.f32 %v1158, 0.37409195
      %v1163 = vmul.f32 %v1103, %v1159
      %v1164 = vmul.f32 %v1104, %v1160
      %v1165 = vmul.f32 %v1105, %v1161
      %v1166 = vmul.f32 %v1106, %v1162
      %v1167 = vadd.f32 %v1163, 1.0000237
      %v1168 = vadd.f32 %v1164, 1.0000237
      %v1169 = vadd.f32 %v1165, 1.0000237
      %v1170 = vadd.f32 %v1166, 1.0000237
      %v1171 = vmul.f32 %v1103, %v1167
      %v1172 = vmul.f32 %v1104, %v1168
      %v1173 = vmul.f32 %v1105, %v1169
      %v1174 = vmul.f32 %v1106, %v1170
      %v1175 = vadd.f32 %v1171, -1.2655122
      %v1176 = vadd.f32 %v1172, -1.2655122
      %v1177 = vadd.f32 %v1173, -1.2655122
      %v1178 = vadd.f32 %v1174, -1.2655122
      %v1179 = vsub.f32 0.0, %v1091
      %v1180 = vsub.f32 0.0, %v1092
      %v1181 = vsub.f32 0.0, %v1093
      %v1182 = vsub.f32 0.0, %v1094
      %v1183 = vmul.f32 %v1179, %v1091
      %v1184 = vmul.f32 %v1180, %v1092
      %v1185 = vmul.f32 %v1181, %v1093
      %v1186 = vmul.f32 %v1182, %v1094
      %v1187 = vadd.f32 %v1183, %v1175
      %v1188 = vadd.f32 %v1184, %v1176
      %v1189 = vadd.f32 %v1185, %v1177
      %v1190 = vadd.f32 %v1186, %v1178
      %v1191 = vmul.f32 %v1187, 1.442695
      %v1192 = vpow.pop %v1191
      %v1193 = vmul.f32 %v1188, 1.442695
      %v1194 = vpow.pop %v1193
      %v1195 = vmul.f32 %v1189, 1.442695
      %v1196 = vpow.pop %v1195
      %v1197 = vmul.f32 %v1190, 1.442695
      %v1198 = vpow.pop %v1197
      %v1199 = vmul.f32 %v1103, %v1192
      %v1200 = vmul.f32 %v1104, %v1194
      %v1201 = vmul.f32 %v1105, %v1196
      %v1202 = vmul.f32 %v1106, %v1198
      %v1203 = vsub.f32 1.0, %v1199
      %v1204 = vsub.f32 1.0, %v1200
      %v1205 = vsub.f32 1.0, %v1201
      %v1206 = vsub.f32 1.0, %v1202
      %vm1207 = vcmp.ge.f32.partialorder %v1087, 0.0
      %vm1208 = vcmp.ge.f32.partialorder %v1088, 0.0
      %vm1209 = vcmp.ge.f32.partialorder %v1089, 0.0
      %vm1210 = vcmp.ge.f32.partialorder %v1090, 0.0
      %v1211 = vsub.f32 0.0, %v1203
      %v1212 = vsub.f32 0.0, %v1204
      %v1213 = vsub.f32 0.0, %v1205
      %v1214 = vsub.f32 0.0, %v1206
      %v1215 = vsel %vm1207, %v1203, %v1211
      %v1216 = vsel %vm1208, %v1204, %v1212
      %v1217 = vsel %vm1209, %v1205, %v1213
      %v1218 = vsel %vm1210, %v1206, %v1214
      %v1219 = vadd.f32 %v1215, 1.0
      %v1220 = vadd.f32 %v1216, 1.0
      %v1221 = vadd.f32 %v1217, 1.0
      %v1222 = vadd.f32 %v1218, 1.0
      %v1223 = vmul.f32 %v1083, %v1219
      %v1224 = vmul.f32 %v1084, %v1220
      %v1225 = vmul.f32 %v1085, %v1221
      %v1226 = vmul.f32 %v1086, %v1222
      %v1227 = vmul.f32 %v997, %v1223
      %v1228 = vmul.f32 %v1000, %v1224
      %v1229 = vmul.f32 %v1005, %v1225
      %v1230 = vmul.f32 %v1008, %v1226
      %v1231 = vpack.c.bf16 %v1228, %v1227
      %v1232 = vpack.c.bf16 %v1230, %v1229
      %v1233 = vld [vmem:[%s12] sm:$0xf]
      %v1234 = vld [vmem:[%s12 + $0x4] sm:$0xf]
      %v1235 = vld [vmem:[%s12 + $0x8] sm:$0xf]
      %v1236 = vld [vmem:[%s12 + $0xc] sm:$0xf]
      %v1237 = vld [vmem:[%s12 + $0x10] sm:$0xf]
      %v1238 = vld [vmem:[%s12 + $0x14] sm:$0xf]
      %v1239 = vld [vmem:[%s12 + $0x18] sm:$0xf]
      %v1240 = vld [vmem:[%s12 + $0x1c] sm:$0xf]
      %v1241 = vld [vmem:[%s12 + $0x20] sm:$0xf]
      %v1242 = vld [vmem:[%s12 + $0x24] sm:$0xf]
      %v1243 = vld [vmem:[%s12 + $0x28] sm:$0xf]
      %v1244 = vld [vmem:[%s12 + $0x2c] sm:$0xf]
      %v1245 = vld [vmem:[%s12 + $0x30] sm:$0xf]
      %v1246 = vld [vmem:[%s12 + $0x34] sm:$0xf]
      %v1247 = vld [vmem:[%s12 + $0x38] sm:$0xf]
      %v1248 = vld [vmem:[%s12 + $0x3c] sm:$0xf]
      %v1249 = vld [vmem:[%s13] sm:$0x1]
      %v1251 = vlaneseq
      %v1252 = vshrl.u32 %v1251, 7
      %v1253 = vsub.s32 0, %v1252
      %v1254 = vrot.slane %v1249, %v1253
      %v1272 = vunpack.c.l.b16 %v1233
      %v1273 = vunpack.c.l.b16 %v1234
      %v1274 = vunpack.c.l.b16 %v1235
      %v1275 = vunpack.c.l.b16 %v1236
      %v1276 = vunpack.c.l.b16 %v1237
      %v1277 = vunpack.c.l.b16 %v1238
      %v1278 = vunpack.c.l.b16 %v1239
      %v1279 = vunpack.c.l.b16 %v1240
      %v1280 = vunpack.c.l.b16 %v1241
      %v1281 = vunpack.c.l.b16 %v1242
      %v1282 = vunpack.c.l.b16 %v1243
      %v1283 = vunpack.c.l.b16 %v1244
      %v1284 = vunpack.c.l.b16 %v1245
      %v1285 = vunpack.c.l.b16 %v1246
      %v1286 = vunpack.c.l.b16 %v1247
      %v1287 = vunpack.c.l.b16 %v1248
      %v1288 = vpack.c.b16 %v1273, %v1272
      %v1289 = vpack.c.b16 %v1275, %v1274
      %v1290 = vpack.c.b16 %v1277, %v1276
      %v1291 = vpack.c.b16 %v1279, %v1278
      %v1292 = vpack.c.b16 %v1281, %v1280
      %v1293 = vpack.c.b16 %v1283, %v1282
      %v1294 = vpack.c.b16 %v1285, %v1284
      %v1295 = vpack.c.b16 %v1287, %v1286
      %1304 = vmatprep.subr.bf16.mxu0 0
      %1305 = vmatpush1.bf16.msra.mxu0 %v1295
      %1306 = vmatprep.subr.bf16.mxu0 0
      %1307 = vmatpush1.bf16.msra.mxu0 %v1294
      %1308 = vmatprep.subr.bf16.mxu0 0
      %1309 = vmatpush1.bf16.msra.mxu0 %v1293
      %1310 = vmatprep.subr.bf16.mxu0 0
      %1311 = vmatpush1.bf16.msra.mxu0 %v1292
      %1312 = vmatprep.subr.bf16.mxu0 0
      %1313 = vmatpush1.bf16.msra.mxu0 %v1291
      %1314 = vmatprep.subr.bf16.mxu0 0
      %1315 = vmatpush1.bf16.msra.mxu0 %v1290
      %1316 = vmatprep.subr.bf16.mxu0 0
      %1317 = vmatpush1.bf16.msra.mxu0 %v1289
      %1318 = vmatprep.subr.bf16.mxu0 0
      %1319 = vmatpush1.bf16.msra.mxu0 %v1288
      %1320 = vmatprep.subr.bf16.mxu0 0
      %1321 = vmatpush2.bf16.msra.mxu0 0
      %1322 = vmatprep.subr.bf16.mxu0 0
      %1323 = vmatpush2.bf16.msra.mxu0 0
      %1324 = vmatprep.subr.bf16.mxu0 0
      %1325 = vmatpush2.bf16.msra.mxu0 0
      %1326 = vmatprep.subr.bf16.mxu0 0
      %1327 = vmatpush2.bf16.msra.mxu0 0
      %1328 = vmatprep.subr.bf16.mxu0 0
      %1329 = vmatpush2.bf16.msra.mxu0 0
      %1330 = vmatprep.subr.bf16.mxu0 0
      %1331 = vmatpush2.bf16.msra.mxu0 0
      %1332 = vmatprep.subr.bf16.mxu0 0
      %1333 = vmatpush2.bf16.msra.mxu0 0
      %1334 = vmatprep.subr.bf16.mxu0 0
      %1335 = vmatpush2.bf16.msra.mxu0 0
      %1336 = vmatprep.mubr.bf16.mxu0 0
      %1337 = vmatmul.mubr.bf16.gmra.mxu0 %v1231
      %v1338 = vpop.f32.mrf.mxu0
      %v1339 = vadd.f32 %v1254, %v1338
      %v1340 = vpop.f32.mrf.mxu0
      %v1341 = vpop.f32.mrf.mxu0
      %v1342 = vadd.f32 %v1254, %v1341
      %v1343 = vpop.f32.mrf.mxu0
      %1344 = vmatprep.mubr.bf16.mxu0 0
      %1345 = vmatmul.mubr.bf16.gmra.mxu0 %v1232
      %v1346 = vpop.f32.mrf.mxu0
      %v1347 = vadd.f32 %v1254, %v1346
      %v1348 = vpop.f32.mrf.mxu0
      %v1349 = vpop.f32.mrf.mxu0
      %v1350 = vadd.f32 %v1254, %v1349
      %v1351 = vpop.f32.mrf.mxu0
      %1352 = vdwg.mxu0
      %v1353 = vadd.f32 %v1339, %v863
      %v1354 = vadd.f32 %v1342, %v864
      %v1355 = vadd.f32 %v1347, %v865
      %v1356 = vadd.f32 %v1350, %v866
      %v1357 = vpack.c.bf16 %v1354, %v1353
      %v1358 = vpack.c.bf16 %v1356, %v1355
      %v1359 = vld [vmem:[%s14] sm:$0xf]
      %v1360 = vld [vmem:[%s14 + $0x4] sm:$0xf]
      %v1361 = vld [vmem:[%s14 + $0x8] sm:$0xf]
      %v1362 = vld [vmem:[%s14 + $0xc] sm:$0xf]
      %v1363 = vld [vmem:[%s15] sm:$0x1]
      %v1365 = vlaneseq
      %v1366 = vshrl.u32 %v1365, 7
      %v1367 = vsub.s32 0, %v1366
      %v1368 = vrot.slane %v1363, %v1367
      %v1374 = vunpack.c.l.b16 %v1359
      %v1375 = vunpack.c.l.b16 %v1360
      %v1376 = vunpack.c.l.b16 %v1361
      %v1377 = vunpack.c.l.b16 %v1362
      %v1378 = vpack.c.b16 %v1375, %v1374
      %v1379 = vpack.c.b16 %v1377, %v1376
      %v1383 = vsel %vm630, %v1357, 0
      %v1386 = vsel %vm630, %v1358, 0
      %1388 = vmatprep.subr.bf16.mxu0 0
      %1389 = vmatpush1.bf16.msra.mxu0 0
      %1390 = vmatprep.subr.bf16.mxu0 0
      %1391 = vmatpush1.bf16.msra.mxu0 0
      %1392 = vmatprep.subr.bf16.mxu0 0
      %1393 = vmatpush1.bf16.msra.mxu0 0
      %1394 = vmatprep.subr.bf16.mxu0 0
      %1395 = vmatpush1.bf16.msra.mxu0 0
      %1396 = vmatprep.subr.bf16.mxu0 0
      %1397 = vmatpush1.bf16.msra.mxu0 0
      %1398 = vmatprep.subr.bf16.mxu0 0
      %1399 = vmatpush1.bf16.msra.mxu0 0
      %1400 = vmatprep.subr.bf16.mxu0 0
      %1401 = vmatpush1.bf16.msra.mxu0 %v1379
      %1402 = vmatprep.subr.bf16.mxu0 0
      %1403 = vmatpush1.bf16.msra.mxu0 %v1378
      %1404 = vmatprep.subr.bf16.mxu0 0
      %1405 = vmatpush2.bf16.msra.mxu0 0
      %1406 = vmatprep.subr.bf16.mxu0 0
      %1407 = vmatpush2.bf16.msra.mxu0 0
      %1408 = vmatprep.subr.bf16.mxu0 0
      %1409 = vmatpush2.bf16.msra.mxu0 0
      %1410 = vmatprep.subr.bf16.mxu0 0
      %1411 = vmatpush2.bf16.msra.mxu0 0
      %1412 = vmatprep.subr.bf16.mxu0 0
      %1413 = vmatpush2.bf16.msra.mxu0 0
      %1414 = vmatprep.subr.bf16.mxu0 0
      %1415 = vmatpush2.bf16.msra.mxu0 0
      %1416 = vmatprep.subr.bf16.mxu0 0
      %1417 = vmatpush2.bf16.msra.mxu0 0
      %1418 = vmatprep.subr.bf16.mxu0 0
      %1419 = vmatpush2.bf16.msra.mxu0 0
      %1420 = vmatprep.mubr.bf16.mxu0 0
      %1421 = vmatmul.mubr.bf16.gmra.mxu0 %v1383
      %v1422 = vpop.f32.mrf.mxu0
      %v1423 = vadd.f32 %v1368, %v1422
      %v1424 = vpop.f32.mrf.mxu0
      %v1425 = vpop.f32.mrf.mxu0
      %v1426 = vadd.f32 %v1368, %v1425
      %v1427 = vpop.f32.mrf.mxu0
      %1428 = vmatprep.mubr.bf16.mxu0 0
      %1429 = vmatmul.mubr.bf16.gmra.mxu0 %v1386
      %v1430 = vpop.f32.mrf.mxu0
      %v1431 = vadd.f32 %v1368, %v1430
      %v1432 = vpop.f32.mrf.mxu0
      %v1433 = vpop.f32.mrf.mxu0
      %v1434 = vadd.f32 %v1368, %v1433
      %v1435 = vpop.f32.mrf.mxu0
      %1436 = vdwg.mxu0
      %v1437 = vadd.f32 %v1423, %v590
      %v1438 = vadd.f32 %v1426, %v591
      %v1439 = vadd.f32 %v1431, %v592
      %v1440 = vadd.f32 %v1434, %v593
      %1441 = vst.msk [vmem:[%s587] sm:$0xff] %vm630, %v1437
      %1442 = vst.msk [vmem:[%s587 + $0x8] sm:$0xff] %vm630, %v1438
      %1443 = vst.msk [vmem:[%s587 + $0x10] sm:$0xff] %vm630, %v1439
      %1444 = vst.msk [vmem:[%s587 + $0x18] sm:$0xff] %vm630, %v1440
      %s1445 = smul.u32 4, %s32
      %p1446 = scmp.lt.s32.totalorder %s31, 1
      %s1447 = scalar_select %p1446, %s31, 1
      %p1448 = scmp.lt.s32.totalorder %s1445, 7
      %s1449 = scalar_select %p1448, %s1445, 7
      %s1450 = smul.addr %s1447, 8
      %s1451 = sadd.s32 %s1449, %s1450
      %s1452 = smul.addr %s1451, 8
      %s1453 = scalar_lea.vmem %s16, %s1452
      // Predicated region
      $region85: #{tpu_custom_call.1} parent=83 // pred_check
        %p1454 = pneg %p412
      $region86: #{tpu_custom_call.1} parent=83 // pred_check_branch
        %1456 = sbr.rel (%p1454) target = $region88
      $region87: #{tpu_custom_call.1} parent=83 // pred_region
        %s1457 = smul.u32 4, %s32
      $region88: #{tpu_custom_call.1} parent=83 // pred_fallthru
        _
    $region84: #{tpu_custom_call.1} parent=5 // pred_fallthru
      _
    %p1458 = scmp.le.s32.totalorder 2, %s22
    // Predicated region
    $region89: #{tpu_custom_call.1} parent=5 // pred_check
      %p1459 = pneg %p1458
    $region90: #{tpu_custom_call.1} parent=5 // pred_check_branch
      %1461 = sbr.rel (%p1459) target = $region92
    $region91: #{tpu_custom_call.1} parent=5 // pred_region
      %s1462 = ssub.s32 %s22, 2
      // Predicated region
      $region93: #{tpu_custom_call.1} parent=91 // pred_check
        %p1463 = pneg %p418
      $region94: #{tpu_custom_call.1} parent=91 // pred_check_branch
        %1465 = sbr.rel (%p1463) target = $region96
      $region95: #{tpu_custom_call.1} parent=91 // pred_region
        %s1466 = smul.u32 4, %s34
        %p1467 = scmp.lt.s32.totalorder %s33, 1
        %s1468 = scalar_select %p1467, %s33, 1
        %p1469 = scmp.lt.s32.totalorder %s1466, 7
        %s1470 = scalar_select %p1469, %s1466, 7
        %s1471 = smul.addr %s1468, 8
        %s1472 = sadd.s32 %s1470, %s1471
        %s1473 = smul.addr %s1472, 8
        %s1474 = scalar_lea.vmem %s16, %s1473
      $region96: #{tpu_custom_call.1} parent=91 // pred_fallthru
        _
    $region92: #{tpu_custom_call.1} parent=5 // pred_fallthru
      _
  $region6: #{tpu_custom_call.1} parent=0 // loop_footer
    %s26 = sadd.s32 1, %s22
  $region7: #{tpu_custom_call.1} parent=0 // loop_footer_branch
    %21 = sbr.rel target = $region3
  $region8: #{tpu_custom_call.1} parent=0 // loop_exit
    _

</llo_original>
